<compile_context>
chip_gen: v6e
topology: v6e:2x2x1
jax: 0.10.0
libtpu: 0.0.40
codegen_flags: <defaults>
</compile_context>

<pallas_src>
import functools

import jax
import jax.numpy as jnp
from jax import lax
from jax.experimental import pallas as pl
from jax.experimental.pallas import tpu as pltpu

EPS = 1e-5
_MIB = 1024 * 1024


def _vmem_limit_bytes():
    """Generation-aware VMEM limit (~48 MiB budget on v7x, ~96 MiB on v5e/v6e)."""
    cap = 64 * _MIB
    try:
        cap = int(getattr(pltpu.get_tpu_info(), "vmem_capacity_bytes", cap))
    except Exception:
        pass
    return int(min(100 * _MIB, 0.75 * cap))


def _compiler_params(vmem_limit):
    return pltpu.CompilerParams(
        dimension_semantics=("parallel",),
        vmem_limit_bytes=int(vmem_limit),
    )


# --------------------------------------------------------------------------- #
# Input prep: pad + parity split (keeps every conv tap a unit-stride slice)
# --------------------------------------------------------------------------- #
def _parity_split(x_nhwc, stride):
    """Zero-pad by 1 and split into stride x stride parity planes.

    xq[n, p, q, t, u, c] == xpad[n, t*stride + p, u*stride + q, c], so every tap of
    a 3x3 (or 1x1) conv with this stride is a unit-stride static slice in-kernel.
    """
    n, h, w, c = x_nhwc.shape
    hp, wp = h + 2, w + 2
    eh, ew = (-hp) % stride, (-wp) % stride
    xp = jnp.pad(x_nhwc, ((0, 0), (1, 1 + eh), (1, 1 + ew), (0, 0)))  # single pad pass
    hq, wq = (hp + eh) // stride, (wp + ew) // stride
    return xp.reshape(n, hq, stride, wq, stride, c).transpose(0, 2, 4, 1, 3, 5)


# --------------------------------------------------------------------------- #
# Kernel 1: conv3x3(stride) + optional 1x1 shortcut conv + packed BN partial stats
# --------------------------------------------------------------------------- #
def _conv_in_kernel(xq_ref, w_ref, *rest, stride, bt, ho, wo, has_right):
    if has_right:
        wr_ref, c_ref, st_ref, cr_ref, str_ref = rest
    else:
        c_ref, st_ref = rest
    cin, cout = w_ref.shape[2], w_ref.shape[3]
    m = bt * ho * wo

    acc = jnp.zeros((m, cout), jnp.float32)
    for kh in range(3):
        for kw in range(3):
            p, q = kh % stride, kw % stride
            a, b = kh // stride, kw // stride
            # (bt, ho, wo, cin) -> (bt*ho*wo, cin): lane dim (cin) unchanged.
            patch = xq_ref[:, p, q, a:a + ho, b:b + wo, :].reshape(m, cin)
            acc = acc + jnp.dot(patch, w_ref[kh, kw],
                                preferred_element_type=jnp.float32)
    c_ref[...] = acc.astype(c_ref.dtype)
    st_ref[0, 0:1, :] = jnp.sum(acc, axis=0, keepdims=True)        # BN partial sum
    st_ref[0, 1:2, :] = jnp.sum(acc * acc, axis=0, keepdims=True)  # BN partial sumsq

    if has_right:  # 1x1 shortcut conv, stride folded into the same parity layout
        p, a = 1 % stride, 1 // stride
        patch = xq_ref[:, p, p, a:a + ho, a:a + wo, :].reshape(m, cin)
        accr = jnp.dot(patch, wr_ref[...], preferred_element_type=jnp.float32)
        cr_ref[...] = accr.astype(cr_ref.dtype)
        str_ref[0, 0:1, :] = jnp.sum(accr, axis=0, keepdims=True)
        str_ref[0, 1:2, :] = jnp.sum(accr * accr, axis=0, keepdims=True)


def _conv_in_call(xq, w1, wr, stride, bt, ho, wo, store_dtype, vmem_limit):
    n = xq.shape[0]
    cout = w1.shape[3]
    steps, m = n // bt, bt * ho * wo
    has_right = wr is not None
    kern = functools.partial(_conv_in_kernel, stride=stride, bt=bt, ho=ho, wo=wo,
                             has_right=has_right)
    in_specs = [
        pl.BlockSpec((bt,) + tuple(xq.shape[1:]), lambda b: (b, 0, 0, 0, 0, 0)),
        pl.BlockSpec(tuple(w1.shape), lambda b: (0, 0, 0, 0)),
    ]
    args = [xq, w1]
    out_shape = [
        jax.ShapeDtypeStruct((n * ho * wo, cout), store_dtype),
        jax.ShapeDtypeStruct((steps, 2, cout), jnp.float32),
    ]
    out_specs = [
        pl.BlockSpec((m, cout), lambda b: (b, 0)),
        pl.BlockSpec((1, 2, cout), lambda b: (b, 0, 0)),
    ]
    if has_right:
        in_specs.append(pl.BlockSpec(tuple(wr.shape), lambda b: (0, 0)))
        args.append(wr)
        out_shape += [jax.ShapeDtypeStruct((n * ho * wo, cout), store_dtype),
                      jax.ShapeDtypeStruct((steps, 2, cout), jnp.float32)]
        out_specs += [pl.BlockSpec((m, cout), lambda b: (b, 0)),
                      pl.BlockSpec((1, 2, cout), lambda b: (b, 0, 0))]
    return pl.pallas_call(
        kern,
        out_shape=tuple(out_shape),
        grid=(steps,),
        in_specs=in_specs,
        out_specs=tuple(out_specs),
        compiler_params=_compiler_params(vmem_limit),
    )(*args)


# --------------------------------------------------------------------------- #
# Kernel 2: conv3x3(stride=1) with BN1 affine + ReLU fused on its input
#           (padded input built in VMEM scratch), plus packed BN2 partial stats
# --------------------------------------------------------------------------- #
def _conv_mid_kernel(c1_ref, sc_ref, sh_ref, w_ref, c2_ref, st_ref, h_ref,
                     *, bt, ho, wo):
    cout = w_ref.shape[3]
    m = bt * ho * wo

    # Build the zero-padded conv2 input in VMEM: zero scratch, overwrite interior.
    # (No HBM pad pass, no per-element halo masking.)
    h_ref[...] = jnp.zeros_like(h_ref)
    hin = jnp.maximum(c1_ref[...].astype(jnp.float32) * sc_ref[...] + sh_ref[...], 0.0)
    h_ref[:, 1:1 + ho, 1:1 + wo, :] = hin.reshape(bt, ho, wo, cout).astype(h_ref.dtype)

    acc = jnp.zeros((m, cout), jnp.float32)
    for kh in range(3):
        for kw in range(3):
            patch = h_ref[:, kh:kh + ho, kw:kw + wo, :].reshape(m, cout)
            acc = acc + jnp.dot(patch, w_ref[kh, kw],
                                preferred_element_type=jnp.float32)
    c2_ref[...] = acc.astype(c2_ref.dtype)
    st_ref[0, 0:1, :] = jnp.sum(acc, axis=0, keepdims=True)
    st_ref[0, 1:2, :] = jnp.sum(acc * acc, axis=0, keepdims=True)


def _conv_mid_call(c1, scale1, shift1, w2, bt, ho, wo, store_dtype, compute_dtype,
                   vmem_limit):
    cout = w2.shape[3]
    rows = c1.shape[0]
    m = bt * ho * wo
    steps = rows // m
    kern = functools.partial(_conv_mid_kernel, bt=bt, ho=ho, wo=wo)
    return pl.pallas_call(
        kern,
        out_shape=(
            jax.ShapeDtypeStruct((rows, cout), store_dtype),
            jax.ShapeDtypeStruct((steps, 2, cout), jnp.float32),
        ),
        grid=(steps,),
        in_specs=[
            pl.BlockSpec((m, cout), lambda b: (b, 0)),
            pl.BlockSpec((1, cout), lambda b: (0, 0)),
            pl.BlockSpec((1, cout), lambda b: (0, 0)),
            pl.BlockSpec(tuple(w2.shape), lambda b: (0, 0, 0, 0)),
        ],
        out_specs=(
            pl.BlockSpec((m, cout), lambda b: (b, 0)),
            pl.BlockSpec((1, 2, cout), lambda b: (b, 0, 0)),
        ),
        scratch_shapes=[pltpu.VMEM((bt, ho + 2, wo + 2, cout), compute_dtype)],
        compiler_params=_compiler_params(vmem_limit),
    )(c1, scale1, shift1, w2)


# --------------------------------------------------------------------------- #
# Kernel 3: BN2 affine + shortcut-BN affine + residual add + ReLU (lane-dense rows)
# --------------------------------------------------------------------------- #
def _combine_kernel(a_ref, sa_ref, ba_ref, b_ref, sb_ref, bb_ref, o_ref):
    left = a_ref[...].astype(jnp.float32) * sa_ref[...] + ba_ref[...]
    right = b_ref[...].astype(jnp.float32) * sb_ref[...] + bb_ref[...]
    o_ref[...] = jnp.maximum(left + right, 0.0)


def _combine_call(a, sa, ba, b, sb, bb, block_rows, vmem_limit):
    rows, lanes = a.shape
    steps = rows // block_rows
    return pl.pallas_call(
        _combine_kernel,
        out_shape=jax.ShapeDtypeStruct((rows, lanes), jnp.float32),
        grid=(steps,),
        in_specs=[
            pl.BlockSpec((block_rows, lanes), lambda r: (r, 0)),
            pl.BlockSpec((1, lanes), lambda r: (0, 0)),
            pl.BlockSpec((1, lanes), lambda r: (0, 0)),
            pl.BlockSpec((block_rows, lanes), lambda r: (r, 0)),
            pl.BlockSpec((1, lanes), lambda r: (0, 0)),
            pl.BlockSpec((1, lanes), lambda r: (0, 0)),
        ],
        out_specs=pl.BlockSpec((block_rows, lanes), lambda r: (r, 0)),
        compiler_params=_compiler_params(vmem_limit),
    )(a, sa, ba, b, sb, bb)


# --------------------------------------------------------------------------- #
# Glue: BN scale/shift from fused partial stats, tiling heuristics, forward pass
# --------------------------------------------------------------------------- #
def _bn_scale_shift(stats, count, gamma, beta):
    """Training-mode BatchNorm2d (unbiased=False) from packed per-step partial sums."""
    tot = jnp.sum(stats, axis=0)                 # (2, C): [sum, sum of squares]
    mean = tot[0] / count
    # E[x^2]-E[x]^2 in f32, clamped at 0 (cancellation guard).
    var = jnp.maximum(tot[1] / count - mean * mean, 0.0)
    scale = gamma / jnp.sqrt(var + EPS)
    shift = beta - mean * scale
    return scale.reshape(1, -1), shift.reshape(1, -1)


def _pick_batch_tile(n, h, w, cin, cout, ho, wo, stride, has_right, esize, budget):
    """Images per grid step: as large as the VMEM budget allows while keeping >=2
    parallel grid steps (v7x shards the parallel axis across its 2 TensorCores)."""
    if (ho * wo) % 8 != 0:
        return n                                  # full-row blocks for the (8,128) rule
    hq = (h + 2 + (-(h + 2)) % stride) // stride
    wq = (w + 2 + (-(w + 2)) % stride) // stride
    per_img = esize * (
        2 * stride * stride * hq * wq * cin                 # xq block (double-buffered)
        + 2 * (3 if has_right else 2) * ho * wo * cout      # conv1[/shortcut]/conv2 out
        + (ho + 2) * (wo + 2) * cout                        # conv2 padded-input scratch
        + 2 * ho * wo * cout                                # conv2 input block
    )
    cands = [bt for bt in range(1, n + 1) if n % bt == 0 and bt * per_img <= budget]
    if not cands:
        return 1
    multi = [bt for bt in cands if n // bt >= 2]
    return max(multi) if multi else max(cands)


def _pick_row_block(rows, target=512):
    """Row block for the elementwise combine: big (toward 512 rows) but keeping >=2
    grid steps; must divide `rows` and be a multiple of 8 (or equal `rows`)."""
    if rows % 8 != 0:
        return rows
    best = rows
    cap = min(target, rows // 2 if rows >= 16 else rows)
    d = 8
    while d <= cap:
        if rows % d == 0:
            best = d
        d += 8
    return best


def residual_block_forward(x_nchw, params, first_stride, compute_dtype=jnp.bfloat16):
    """Pallas forward pass of ResidualBlock (module in training mode).

    x_nchw: (N, in_feats, H, W) float32
    returns (N, out_feats, H / first_stride, W / first_stride) float32
    """
    # TODO(synk): BatchNorm running_mean/running_var/num_batches_tracked buffer updates
    # (training-state side effects) are not materialized; the training-mode forward
    # output does not depend on them.
    x = jnp.transpose(x_nchw, (0, 2, 3, 1)).astype(jnp.float32)   # NCHW -> NHWC
    n, h, w, cin = x.shape
    cout = params["w1"].shape[0]
    assert h % first_stride == 0 and w % first_stride == 0
    ho, wo = h // first_stride, w // first_stride
    count = n * ho * wo
    has_right = first_stride != 1

    vmem_limit = _vmem_limit_bytes()
    esize = max(jnp.dtype(compute_dtype).itemsize, 4)
    bt = _pick_batch_tile(n, h, w, cin, cout, ho, wo, first_stride, has_right,
                          esize, vmem_limit // 2)

    # ---- layout prep (cast to the MXU dtype first so layout passes move fewer bytes)
    xq = _parity_split(x.astype(compute_dtype), first_stride)    # (n,s,s,hq,wq,cin)
    w1 = jnp.transpose(params["w1"], (2, 3, 1, 0)).astype(compute_dtype)  # (3,3,cin,cout)
    w2 = jnp.transpose(params["w2"], (2, 3, 1, 0)).astype(compute_dtype)
    wr = (jnp.transpose(params["wr"], (2, 3, 1, 0)).reshape(cin, cout)
          .astype(compute_dtype) if has_right else None)

    # ---- kernel 1: conv1 (+ shortcut conv) + packed BN partial stats ----
    outs = _conv_in_call(xq, w1, wr, first_stride, bt, ho, wo, compute_dtype, vmem_limit)
    if has_right:
        c1, st1, cr, str_ = outs
    else:
        c1, st1 = outs
    scale1, shift1 = _bn_scale_shift(st1, count, params["bn1_gamma"], params["bn1_beta"])

    # ---- kernel 2: conv2 with BN1 affine + ReLU fused on its input (VMEM-padded) ----
    c2, st2 = _conv_mid_call(c1, scale1, shift1, w2, bt, ho, wo, compute_dtype,
                             compute_dtype, vmem_limit)
    scale2, shift2 = _bn_scale_shift(st2, count, params["bn2_gamma"], params["bn2_beta"])

    # ---- kernel 3: BN2 + shortcut-BN + add + ReLU on lane-dense (n*ho, wo*C) rows ----
    rows, lanes = n * ho, wo * cout
    left = c2.reshape(rows, lanes)                       # row-major => free reshape
    s2l, b2l = jnp.tile(scale2, (1, wo)), jnp.tile(shift2, (1, wo))
    if has_right:
        scaler, shiftr = _bn_scale_shift(str_, count,
                                         params["bnr_gamma"], params["bnr_beta"])
        right = cr.reshape(rows, lanes)
        srl, brl = jnp.tile(scaler, (1, wo)), jnp.tile(shiftr, (1, wo))
    else:
        assert cin == cout, "identity shortcut requires in_feats == out_feats"
        right = x.reshape(rows, lanes)                   # residual uses unquantized x
        srl = jnp.ones((1, lanes), jnp.float32)
        brl = jnp.zeros((1, lanes), jnp.float32)

    out = _combine_call(left, s2l, b2l, right, srl, brl,
                        _pick_row_block(rows), vmem_limit)
    return jnp.transpose(out.reshape(n, ho, wo, cout), (0, 3, 1, 2))  # NHWC -> NCHW


# --------------------------------------------------------------------------- #
# Pure-JAX reference (mirrors the PyTorch module in training mode).  Inputs and
# weights are quantized to compute_dtype so the reference matches the kernel's
# MXU operand precision (f32 accumulation on both sides).
# --------------------------------------------------------------------------- #
def _conv_ref(x, w, stride, padding):
    return lax.conv_general_dilated(
        x, w, window_strides=(stride, stride),
        padding=((padding, padding), (padding, padding)),
        dimension_numbers=("NCHW", "OIHW", "NCHW"),
        precision=lax.Precision.HIGHEST,
    )


def _bn_ref(x, gamma, beta):
    mean = x.mean(axis=(0, 2, 3), keepdims=True)
    var = ((x - mean) ** 2).mean(axis=(0, 2, 3), keepdims=True)
    xn = (x - mean) / jnp.sqrt(var + EPS)
    return xn * gamma.reshape(1, -1, 1, 1) + beta.reshape(1, -1, 1, 1)


def residual_block_ref(x, params, first_stride, compute_dtype=jnp.bfloat16):
    q = lambda a: a.astype(compute_dtype).astype(jnp.float32)
    xq = q(x)
    left = _conv_ref(xq, q(params["w1"]), first_stride, 1)
    left = jnp.maximum(_bn_ref(left, params["bn1_gamma"], params["bn1_beta"]), 0.0)
    left = _conv_ref(q(left), q(params["w2"]), 1, 1)
    left = _bn_ref(left, params["bn2_gamma"], params["bn2_beta"])
    if first_stride == 1:
        right = x
    else:
        right = _conv_ref(xq, q(params["wr"]), first_stride, 0)
        right = _bn_ref(right, params["bnr_gamma"], params["bnr_beta"])
    return jnp.maximum(left + right, 0.0)


# --------------------------------------------------------------------------- #
def make_params(key, in_feats, out_feats, first_stride):
    k1, k2, k3 = jax.random.split(key, 3)
    params = {
        # Conv2d weights (bias=False in this ResNet-style block).
        "w1": 0.1 * jax.random.normal(k1, (out_feats, in_feats, 3, 3), jnp.float32),
        "w2": 0.1 * jax.random.normal(k2, (out_feats, out_feats, 3, 3), jnp.float32),
        # BatchNorm2d __init__: weight=ones, bias=zeros.
        "bn1_gamma": jnp.ones((out_feats,), jnp.float32),
        "bn1_beta": jnp.zeros((out_feats,), jnp.float32),
        "bn2_gamma": jnp.ones((out_feats,), jnp.float32),
        "bn2_beta": jnp.zeros((out_feats,), jnp.float32),
    }
    if first_stride != 1:
        params["wr"] = 0.1 * jax.random.normal(
            k3, (out_feats, in_feats, 1, 1), jnp.float32)
        params["bnr_gamma"] = jnp.ones((out_feats,), jnp.float32)
        params["bnr_beta"] = jnp.zeros((out_feats,), jnp.float32)
    return params


def _check(out, ref, max_tol, mean_tol):
    err = jnp.abs(out - ref)
    mx, mn = float(jnp.max(err)), float(jnp.mean(err))
    assert mx < max_tol and mn < mean_tol, (mx, mn)


if __name__ == "__main__":
    key = jax.random.PRNGKey(0)
    kx1, kp1, kx2, kp2 = jax.random.split(key, 4)

    # ---- config 1: downsampling block (stride 2, channel expansion), bf16 MXU ----
    batch, in_feats, out_feats, spatial, stride = 2, 4, 8, 16, 2
    x1 = jax.random.normal(kx1, (batch, in_feats, spatial, spatial), jnp.float32)
    p1 = make_params(kp1, in_feats, out_feats, stride)

    out1 = jax.block_until_ready(residual_block_forward(x1, p1, stride, jnp.bfloat16))
    ref1 = residual_block_ref(x1, p1, stride, jnp.bfloat16)
    assert out1.shape == (batch, out_feats, spatial // stride, spatial // stride)
    # bf16 MXU operands + bf16-stored intermediates vs an f32-intermediate reference.
    _check(out1, ref1, max_tol=8e-2, mean_tol=6e-3)

    # ---- same config, float32 path: tight check against the fp32 module ----
    out1f = jax.block_until_ready(residual_block_forward(x1, p1, stride, jnp.float32))
    ref1f = residual_block_ref(x1, p1, stride, jnp.float32)
    assert jnp.allclose(out1f, ref1f, atol=2e-4, rtol=2e-4), \
        float(jnp.max(jnp.abs(out1f - ref1f)))

    # ---- config 2: identity-shortcut block (stride 1, in_feats == out_feats) ----
    x2 = jax.random.normal(kx2, (batch, out_feats, spatial // 2, spatial // 2),
                           jnp.float32)
    p2 = make_params(kp2, out_feats, out_feats, 1)
    out2 = jax.block_until_ready(residual_block_forward(x2, p2, 1, jnp.bfloat16))
    ref2 = residual_block_ref(x2, p2, 1, jnp.bfloat16)
    assert out2.shape == x2.shape
    _check(out2, ref2, max_tol=8e-2, mean_tol=6e-3)

    print("KERNEL_OK")
</pallas_src>

<mosaic_0001>
module attributes {stable_mosaic.version = 11 : i64} {
  func.func @_conv_in_kernel(%arg0: i32, %arg1: memref<1x2x2x9x9x4xbf16, #tpu.memory_space<vmem>>, %arg2: memref<3x3x4x8xbf16, #tpu.memory_space<vmem>>, %arg3: memref<4x8xbf16, #tpu.memory_space<vmem>>, %arg4: memref<64x8xbf16, #tpu.memory_space<vmem>>, %arg5: memref<1x2x8xf32, #tpu.memory_space<vmem>>, %arg6: memref<64x8xbf16, #tpu.memory_space<vmem>>, %arg7: memref<1x2x8xf32, #tpu.memory_space<vmem>>) attributes {dimension_semantics = [#tpu.dimension_semantics<parallel>], iteration_bounds = array<i64: 2>, scalar_prefetch = 0 : i64, scratch_operands = 0 : i64, tpu.core_type = #tpu.core_type<tc>, window_params = [{transform_indices = @transform_0, window_bounds = array<i64: 1, 2, 2, 9, 9, 4>}, {pipeline_mode = #tpu.pipeline_mode<synchronous>, transform_indices = @transform_1, window_bounds = array<i64: 3, 3, 4, 8>}, {pipeline_mode = #tpu.pipeline_mode<synchronous>, transform_indices = @transform_2, window_bounds = array<i64: 4, 8>}, {transform_indices = @transform_3, window_bounds = array<i64: 64, 8>}, {transform_indices = @transform_4, window_bounds = array<i64: 1, 2, 8>}, {transform_indices = @transform_5, window_bounds = array<i64: 64, 8>}, {transform_indices = @transform_6, window_bounds = array<i64: 1, 2, 8>}]} {
    %cst = arith.constant 0.000000e+00 : f32
    %0 = vector.broadcast %cst : f32 to vector<64x8xf32>
    %c0 = arith.constant 0 : index
    %c0_0 = arith.constant 0 : index
    %c0_1 = arith.constant 0 : index
    %c0_2 = arith.constant 0 : index
    %c0_3 = arith.constant 0 : index
    %c0_4 = arith.constant 0 : index
    %1 = vector.load %arg1[%c0, %c0_0, %c0_1, %c0_2, %c0_3, %c0_4] : memref<1x2x2x9x9x4xbf16, #tpu.memory_space<vmem>>, vector<1x1x1x8x8x4xbf16>
    %2 = vector.shape_cast %1 : vector<1x1x1x8x8x4xbf16> to vector<1x8x8x4xbf16>
    %3 = vector.shape_cast %2 : vector<1x8x8x4xbf16> to vector<64x4xbf16>
    %c0_5 = arith.constant 0 : index
    %c0_6 = arith.constant 0 : index
    %c0_7 = arith.constant 0 : index
    %c0_8 = arith.constant 0 : index
    %4 = vector.load %arg2[%c0_5, %c0_6, %c0_7, %c0_8] : memref<3x3x4x8xbf16, #tpu.memory_space<vmem>>, vector<1x1x4x8xbf16>
    %5 = vector.shape_cast %4 : vector<1x1x4x8xbf16> to vector<4x8xbf16>
    %cst_9 = arith.constant dense<0.000000e+00> : vector<64x8xf32>
    %6 = tpu.matmul %3, %5, %cst_9 {dimension_numbers = #tpu.dot_dimension_numbers<[1], [0], [0], [1], [0, 0, 1, 1], [], []>} : vector<64x4xbf16>, vector<4x8xbf16>, vector<64x8xf32> -> vector<64x8xf32>
    %7 = arith.addf %0, %6 : vector<64x8xf32>
    %c0_10 = arith.constant 0 : index
    %c0_11 = arith.constant 0 : index
    %c1 = arith.constant 1 : index
    %c0_12 = arith.constant 0 : index
    %c0_13 = arith.constant 0 : index
    %c0_14 = arith.constant 0 : index
    %8 = vector.load %arg1[%c0_10, %c0_11, %c1, %c0_12, %c0_13, %c0_14] : memref<1x2x2x9x9x4xbf16, #tpu.memory_space<vmem>>, vector<1x1x1x8x8x4xbf16>
    %9 = vector.shape_cast %8 : vector<1x1x1x8x8x4xbf16> to vector<1x8x8x4xbf16>
    %10 = vector.shape_cast %9 : vector<1x8x8x4xbf16> to vector<64x4xbf16>
    %c0_15 = arith.constant 0 : index
    %c1_16 = arith.constant 1 : index
    %c0_17 = arith.constant 0 : index
    %c0_18 = arith.constant 0 : index
    %11 = vector.load %arg2[%c0_15, %c1_16, %c0_17, %c0_18] : memref<3x3x4x8xbf16, #tpu.memory_space<vmem>>, vector<1x1x4x8xbf16>
    %12 = vector.shape_cast %11 : vector<1x1x4x8xbf16> to vector<4x8xbf16>
    %cst_19 = arith.constant dense<0.000000e+00> : vector<64x8xf32>
    %13 = tpu.matmul %10, %12, %cst_19 {dimension_numbers = #tpu.dot_dimension_numbers<[1], [0], [0], [1], [0, 0, 1, 1], [], []>} : vector<64x4xbf16>, vector<4x8xbf16>, vector<64x8xf32> -> vector<64x8xf32>
    %14 = arith.addf %7, %13 : vector<64x8xf32>
    %c0_20 = arith.constant 0 : index
    %c0_21 = arith.constant 0 : index
    %c0_22 = arith.constant 0 : index
    %c0_23 = arith.constant 0 : index
    %c1_24 = arith.constant 1 : index
    %c0_25 = arith.constant 0 : index
    %15 = vector.load %arg1[%c0_20, %c0_21, %c0_22, %c0_23, %c1_24, %c0_25] : memref<1x2x2x9x9x4xbf16, #tpu.memory_space<vmem>>, vector<1x1x1x8x8x4xbf16>
    %16 = vector.shape_cast %15 : vector<1x1x1x8x8x4xbf16> to vector<1x8x8x4xbf16>
    %17 = vector.shape_cast %16 : vector<1x8x8x4xbf16> to vector<64x4xbf16>
    %c0_26 = arith.constant 0 : index
    %c2 = arith.constant 2 : index
    %c0_27 = arith.constant 0 : index
    %c0_28 = arith.constant 0 : index
    %18 = vector.load %arg2[%c0_26, %c2, %c0_27, %c0_28] : memref<3x3x4x8xbf16, #tpu.memory_space<vmem>>, vector<1x1x4x8xbf16>
    %19 = vector.shape_cast %18 : vector<1x1x4x8xbf16> to vector<4x8xbf16>
    %cst_29 = arith.constant dense<0.000000e+00> : vector<64x8xf32>
    %20 = tpu.matmul %17, %19, %cst_29 {dimension_numbers = #tpu.dot_dimension_numbers<[1], [0], [0], [1], [0, 0, 1, 1], [], []>} : vector<64x4xbf16>, vector<4x8xbf16>, vector<64x8xf32> -> vector<64x8xf32>
    %21 = arith.addf %14, %20 : vector<64x8xf32>
    %c0_30 = arith.constant 0 : index
    %c1_31 = arith.constant 1 : index
    %c0_32 = arith.constant 0 : index
    %c0_33 = arith.constant 0 : index
    %c0_34 = arith.constant 0 : index
    %c0_35 = arith.constant 0 : index
    %22 = vector.load %arg1[%c0_30, %c1_31, %c0_32, %c0_33, %c0_34, %c0_35] : memref<1x2x2x9x9x4xbf16, #tpu.memory_space<vmem>>, vector<1x1x1x8x8x4xbf16>
    %23 = vector.shape_cast %22 : vector<1x1x1x8x8x4xbf16> to vector<1x8x8x4xbf16>
    %24 = vector.shape_cast %23 : vector<1x8x8x4xbf16> to vector<64x4xbf16>
    %c1_36 = arith.constant 1 : index
    %c0_37 = arith.constant 0 : index
    %c0_38 = arith.constant 0 : index
    %c0_39 = arith.constant 0 : index
    %25 = vector.load %arg2[%c1_36, %c0_37, %c0_38, %c0_39] : memref<3x3x4x8xbf16, #tpu.memory_space<vmem>>, vector<1x1x4x8xbf16>
    %26 = vector.shape_cast %25 : vector<1x1x4x8xbf16> to vector<4x8xbf16>
    %cst_40 = arith.constant dense<0.000000e+00> : vector<64x8xf32>
    %27 = tpu.matmul %24, %26, %cst_40 {dimension_numbers = #tpu.dot_dimension_numbers<[1], [0], [0], [1], [0, 0, 1, 1], [], []>} : vector<64x4xbf16>, vector<4x8xbf16>, vector<64x8xf32> -> vector<64x8xf32>
    %28 = arith.addf %21, %27 : vector<64x8xf32>
    %c0_41 = arith.constant 0 : index
    %c1_42 = arith.constant 1 : index
    %c1_43 = arith.constant 1 : index
    %c0_44 = arith.constant 0 : index
    %c0_45 = arith.constant 0 : index
    %c0_46 = arith.constant 0 : index
    %29 = vector.load %arg1[%c0_41, %c1_42, %c1_43, %c0_44, %c0_45, %c0_46] : memref<1x2x2x9x9x4xbf16, #tpu.memory_space<vmem>>, vector<1x1x1x8x8x4xbf16>
    %30 = vector.shape_cast %29 : vector<1x1x1x8x8x4xbf16> to vector<1x8x8x4xbf16>
    %31 = vector.shape_cast %30 : vector<1x8x8x4xbf16> to vector<64x4xbf16>
    %c1_47 = arith.constant 1 : index
    %c1_48 = arith.constant 1 : index
    %c0_49 = arith.constant 0 : index
    %c0_50 = arith.constant 0 : index
    %32 = vector.load %arg2[%c1_47, %c1_48, %c0_49, %c0_50] : memref<3x3x4x8xbf16, #tpu.memory_space<vmem>>, vector<1x1x4x8xbf16>
    %33 = vector.shape_cast %32 : vector<1x1x4x8xbf16> to vector<4x8xbf16>
    %cst_51 = arith.constant dense<0.000000e+00> : vector<64x8xf32>
    %34 = tpu.matmul %31, %33, %cst_51 {dimension_numbers = #tpu.dot_dimension_numbers<[1], [0], [0], [1], [0, 0, 1, 1], [], []>} : vector<64x4xbf16>, vector<4x8xbf16>, vector<64x8xf32> -> vector<64x8xf32>
    %35 = arith.addf %28, %34 : vector<64x8xf32>
    %c0_52 = arith.constant 0 : index
    %c1_53 = arith.constant 1 : index
    %c0_54 = arith.constant 0 : index
    %c0_55 = arith.constant 0 : index
    %c1_56 = arith.constant 1 : index
    %c0_57 = arith.constant 0 : index
    %36 = vector.load %arg1[%c0_52, %c1_53, %c0_54, %c0_55, %c1_56, %c0_57] : memref<1x2x2x9x9x4xbf16, #tpu.memory_space<vmem>>, vector<1x1x1x8x8x4xbf16>
    %37 = vector.shape_cast %36 : vector<1x1x1x8x8x4xbf16> to vector<1x8x8x4xbf16>
    %38 = vector.shape_cast %37 : vector<1x8x8x4xbf16> to vector<64x4xbf16>
    %c1_58 = arith.constant 1 : index
    %c2_59 = arith.constant 2 : index
    %c0_60 = arith.constant 0 : index
    %c0_61 = arith.constant 0 : index
    %39 = vector.load %arg2[%c1_58, %c2_59, %c0_60, %c0_61] : memref<3x3x4x8xbf16, #tpu.memory_space<vmem>>, vector<1x1x4x8xbf16>
    %40 = vector.shape_cast %39 : vector<1x1x4x8xbf16> to vector<4x8xbf16>
    %cst_62 = arith.constant dense<0.000000e+00> : vector<64x8xf32>
    %41 = tpu.matmul %38, %40, %cst_62 {dimension_numbers = #tpu.dot_dimension_numbers<[1], [0], [0], [1], [0, 0, 1, 1], [], []>} : vector<64x4xbf16>, vector<4x8xbf16>, vector<64x8xf32> -> vector<64x8xf32>
    %42 = arith.addf %35, %41 : vector<64x8xf32>
    %c0_63 = arith.constant 0 : index
    %c0_64 = arith.constant 0 : index
    %c0_65 = arith.constant 0 : index
    %c1_66 = arith.constant 1 : index
    %c0_67 = arith.constant 0 : index
    %c0_68 = arith.constant 0 : index
    %43 = vector.load %arg1[%c0_63, %c0_64, %c0_65, %c1_66, %c0_67, %c0_68] : memref<1x2x2x9x9x4xbf16, #tpu.memory_space<vmem>>, vector<1x1x1x8x8x4xbf16>
    %44 = vector.shape_cast %43 : vector<1x1x1x8x8x4xbf16> to vector<1x8x8x4xbf16>
    %45 = vector.shape_cast %44 : vector<1x8x8x4xbf16> to vector<64x4xbf16>
    %c2_69 = arith.constant 2 : index
    %c0_70 = arith.constant 0 : index
    %c0_71 = arith.constant 0 : index
    %c0_72 = arith.constant 0 : index
    %46 = vector.load %arg2[%c2_69, %c0_70, %c0_71, %c0_72] : memref<3x3x4x8xbf16, #tpu.memory_space<vmem>>, vector<1x1x4x8xbf16>
    %47 = vector.shape_cast %46 : vector<1x1x4x8xbf16> to vector<4x8xbf16>
    %cst_73 = arith.constant dense<0.000000e+00> : vector<64x8xf32>
    %48 = tpu.matmul %45, %47, %cst_73 {dimension_numbers = #tpu.dot_dimension_numbers<[1], [0], [0], [1], [0, 0, 1, 1], [], []>} : vector<64x4xbf16>, vector<4x8xbf16>, vector<64x8xf32> -> vector<64x8xf32>
    %49 = arith.addf %42, %48 : vector<64x8xf32>
    %c0_74 = arith.constant 0 : index
    %c0_75 = arith.constant 0 : index
    %c1_76 = arith.constant 1 : index
    %c1_77 = arith.constant 1 : index
    %c0_78 = arith.constant 0 : index
    %c0_79 = arith.constant 0 : index
    %50 = vector.load %arg1[%c0_74, %c0_75, %c1_76, %c1_77, %c0_78, %c0_79] : memref<1x2x2x9x9x4xbf16, #tpu.memory_space<vmem>>, vector<1x1x1x8x8x4xbf16>
    %51 = vector.shape_cast %50 : vector<1x1x1x8x8x4xbf16> to vector<1x8x8x4xbf16>
    %52 = vector.shape_cast %51 : vector<1x8x8x4xbf16> to vector<64x4xbf16>
    %c2_80 = arith.constant 2 : index
    %c1_81 = arith.constant 1 : index
    %c0_82 = arith.constant 0 : index
    %c0_83 = arith.constant 0 : index
    %53 = vector.load %arg2[%c2_80, %c1_81, %c0_82, %c0_83] : memref<3x3x4x8xbf16, #tpu.memory_space<vmem>>, vector<1x1x4x8xbf16>
    %54 = vector.shape_cast %53 : vector<1x1x4x8xbf16> to vector<4x8xbf16>
    %cst_84 = arith.constant dense<0.000000e+00> : vector<64x8xf32>
    %55 = tpu.matmul %52, %54, %cst_84 {dimension_numbers = #tpu.dot_dimension_numbers<[1], [0], [0], [1], [0, 0, 1, 1], [], []>} : vector<64x4xbf16>, vector<4x8xbf16>, vector<64x8xf32> -> vector<64x8xf32>
    %56 = arith.addf %49, %55 : vector<64x8xf32>
    %c0_85 = arith.constant 0 : index
    %c0_86 = arith.constant 0 : index
    %c0_87 = arith.constant 0 : index
    %c1_88 = arith.constant 1 : index
    %c1_89 = arith.constant 1 : index
    %c0_90 = arith.constant 0 : index
    %57 = vector.load %arg1[%c0_85, %c0_86, %c0_87, %c1_88, %c1_89, %c0_90] : memref<1x2x2x9x9x4xbf16, #tpu.memory_space<vmem>>, vector<1x1x1x8x8x4xbf16>
    %58 = vector.shape_cast %57 : vector<1x1x1x8x8x4xbf16> to vector<1x8x8x4xbf16>
    %59 = vector.shape_cast %58 : vector<1x8x8x4xbf16> to vector<64x4xbf16>
    %c2_91 = arith.constant 2 : index
    %c2_92 = arith.constant 2 : index
    %c0_93 = arith.constant 0 : index
    %c0_94 = arith.constant 0 : index
    %60 = vector.load %arg2[%c2_91, %c2_92, %c0_93, %c0_94] : memref<3x3x4x8xbf16, #tpu.memory_space<vmem>>, vector<1x1x4x8xbf16>
    %61 = vector.shape_cast %60 : vector<1x1x4x8xbf16> to vector<4x8xbf16>
    %cst_95 = arith.constant dense<0.000000e+00> : vector<64x8xf32>
    %62 = tpu.matmul %59, %61, %cst_95 {dimension_numbers = #tpu.dot_dimension_numbers<[1], [0], [0], [1], [0, 0, 1, 1], [], []>} : vector<64x4xbf16>, vector<4x8xbf16>, vector<64x8xf32> -> vector<64x8xf32>
    %63 = arith.addf %56, %62 : vector<64x8xf32>
    %64 = arith.truncf %63 : vector<64x8xf32> to vector<64x8xbf16>
    %c0_96 = arith.constant 0 : index
    %c0_97 = arith.constant 0 : index
    %65 = vector.load %arg4[%c0_96, %c0_97] : memref<64x8xbf16, #tpu.memory_space<vmem>>, vector<64x8xbf16>
    tpu.vector_store %arg4[%c0_96, %c0_97], %64 {strides = array<i32>} : memref<64x8xbf16, #tpu.memory_space<vmem>>, vector<64x8xbf16>,
    %cst_98 = arith.constant dense<0.000000e+00> : vector<8xf32>
    %66 = vector.multi_reduction <add>, %63, %cst_98 [0] : vector<64x8xf32> to vector<8xf32>
    %67 = vector.shape_cast %66 : vector<8xf32> to vector<1x8xf32>
    %c0_99 = arith.constant 0 : index
    %c0_100 = arith.constant 0 : index
    %c0_101 = arith.constant 0 : index
    %68 = vector.load %arg5[%c0_99, %c0_100, %c0_101] : memref<1x2x8xf32, #tpu.memory_space<vmem>>, vector<1x1x8xf32>
    %69 = vector.shape_cast %68 : vector<1x1x8xf32> to vector<1x8xf32>
    %70 = vector.shape_cast %67 : vector<1x8xf32> to vector<1x1x8xf32>
    tpu.vector_store %arg5[%c0_99, %c0_100, %c0_101], %70 {strides = array<i32>} : memref<1x2x8xf32, #tpu.memory_space<vmem>>, vector<1x1x8xf32>,
    %71 = arith.mulf %63, %63 : vector<64x8xf32>
    %cst_102 = arith.constant dense<0.000000e+00> : vector<8xf32>
    %72 = vector.multi_reduction <add>, %71, %cst_102 [0] : vector<64x8xf32> to vector<8xf32>
    %73 = vector.shape_cast %72 : vector<8xf32> to vector<1x8xf32>
    %c0_103 = arith.constant 0 : index
    %c1_104 = arith.constant 1 : index
    %c0_105 = arith.constant 0 : index
    %74 = vector.load %arg5[%c0_103, %c1_104, %c0_105] : memref<1x2x8xf32, #tpu.memory_space<vmem>>, vector<1x1x8xf32>
    %75 = vector.shape_cast %74 : vector<1x1x8xf32> to vector<1x8xf32>
    %76 = vector.shape_cast %73 : vector<1x8xf32> to vector<1x1x8xf32>
    tpu.vector_store %arg5[%c0_103, %c1_104, %c0_105], %76 {strides = array<i32>} : memref<1x2x8xf32, #tpu.memory_space<vmem>>, vector<1x1x8xf32>,
    %c0_106 = arith.constant 0 : index
    %c1_107 = arith.constant 1 : index
    %c1_108 = arith.constant 1 : index
    %c0_109 = arith.constant 0 : index
    %c0_110 = arith.constant 0 : index
    %c0_111 = arith.constant 0 : index
    %77 = vector.load %arg1[%c0_106, %c1_107, %c1_108, %c0_109, %c0_110, %c0_111] : memref<1x2x2x9x9x4xbf16, #tpu.memory_space<vmem>>, vector<1x1x1x8x8x4xbf16>
    %78 = vector.shape_cast %77 : vector<1x1x1x8x8x4xbf16> to vector<1x8x8x4xbf16>
    %79 = vector.shape_cast %78 : vector<1x8x8x4xbf16> to vector<64x4xbf16>
    %c0_112 = arith.constant 0 : index
    %c0_113 = arith.constant 0 : index
    %80 = vector.load %arg3[%c0_112, %c0_113] : memref<4x8xbf16, #tpu.memory_space<vmem>>, vector<4x8xbf16>
    %cst_114 = arith.constant dense<0.000000e+00> : vector<64x8xf32>
    %81 = tpu.matmul %79, %80, %cst_114 {dimension_numbers = #tpu.dot_dimension_numbers<[1], [0], [0], [1], [0, 0, 1, 1], [], []>} : vector<64x4xbf16>, vector<4x8xbf16>, vector<64x8xf32> -> vector<64x8xf32>
    %82 = arith.truncf %81 : vector<64x8xf32> to vector<64x8xbf16>
    %c0_115 = arith.constant 0 : index
    %c0_116 = arith.constant 0 : index
    %83 = vector.load %arg6[%c0_115, %c0_116] : memref<64x8xbf16, #tpu.memory_space<vmem>>, vector<64x8xbf16>
    tpu.vector_store %arg6[%c0_115, %c0_116], %82 {strides = array<i32>} : memref<64x8xbf16, #tpu.memory_space<vmem>>, vector<64x8xbf16>,
    %cst_117 = arith.constant dense<0.000000e+00> : vector<8xf32>
    %84 = vector.multi_reduction <add>, %81, %cst_117 [0] : vector<64x8xf32> to vector<8xf32>
    %85 = vector.shape_cast %84 : vector<8xf32> to vector<1x8xf32>
    %c0_118 = arith.constant 0 : index
    %c0_119 = arith.constant 0 : index
    %c0_120 = arith.constant 0 : index
    %86 = vector.load %arg7[%c0_118, %c0_119, %c0_120] : memref<1x2x8xf32, #tpu.memory_space<vmem>>, vector<1x1x8xf32>
    %87 = vector.shape_cast %86 : vector<1x1x8xf32> to vector<1x8xf32>
    %88 = vector.shape_cast %85 : vector<1x8xf32> to vector<1x1x8xf32>
    tpu.vector_store %arg7[%c0_118, %c0_119, %c0_120], %88 {strides = array<i32>} : memref<1x2x8xf32, #tpu.memory_space<vmem>>, vector<1x1x8xf32>,
    %89 = arith.mulf %81, %81 : vector<64x8xf32>
    %cst_121 = arith.constant dense<0.000000e+00> : vector<8xf32>
    %90 = vector.multi_reduction <add>, %89, %cst_121 [0] : vector<64x8xf32> to vector<8xf32>
    %91 = vector.shape_cast %90 : vector<8xf32> to vector<1x8xf32>
    %c0_122 = arith.constant 0 : index
    %c1_123 = arith.constant 1 : index
    %c0_124 = arith.constant 0 : index
    %92 = vector.load %arg7[%c0_122, %c1_123, %c0_124] : memref<1x2x8xf32, #tpu.memory_space<vmem>>, vector<1x1x8xf32>
    %93 = vector.shape_cast %92 : vector<1x1x8xf32> to vector<1x8xf32>
    %94 = vector.shape_cast %91 : vector<1x8xf32> to vector<1x1x8xf32>
    tpu.vector_store %arg7[%c0_122, %c1_123, %c0_124], %94 {strides = array<i32>} : memref<1x2x8xf32, #tpu.memory_space<vmem>>, vector<1x1x8xf32>,
    return
  }
  func.func @transform_0(%arg0: i32) -> (i32, i32, i32, i32, i32, i32) {
    %c0_i32 = arith.constant 0 : i32
    %c0_i32_0 = arith.constant 0 : i32
    %c0_i32_1 = arith.constant 0 : i32
    %c0_i32_2 = arith.constant 0 : i32
    %c0_i32_3 = arith.constant 0 : i32
    %c0_i32_4 = arith.constant 0 : i32
    return %arg0, %c0_i32, %c0_i32_0, %c0_i32_1, %c0_i32_2, %c0_i32_3 : i32, i32, i32, i32, i32, i32
  }
  func.func @transform_1(%arg0: i32) -> (i32, i32, i32, i32) {
    %c0_i32 = arith.constant 0 : i32
    %c0_i32_0 = arith.constant 0 : i32
    %c0_i32_1 = arith.constant 0 : i32
    %c0_i32_2 = arith.constant 0 : i32
    %c0_i32_3 = arith.constant 0 : i32
    return %c0_i32, %c0_i32_0, %c0_i32_1, %c0_i32_2 : i32, i32, i32, i32
  }
  func.func @transform_2(%arg0: i32) -> (i32, i32) {
    %c0_i32 = arith.constant 0 : i32
    %c0_i32_0 = arith.constant 0 : i32
    %c0_i32_1 = arith.constant 0 : i32
    return %c0_i32, %c0_i32_0 : i32, i32
  }
  func.func @transform_3(%arg0: i32) -> (i32, i32) {
    %c0_i32 = arith.constant 0 : i32
    %c0_i32_0 = arith.constant 0 : i32
    return %arg0, %c0_i32 : i32, i32
  }
  func.func @transform_4(%arg0: i32) -> (i32, i32, i32) {
    %c0_i32 = arith.constant 0 : i32
    %c0_i32_0 = arith.constant 0 : i32
    %c0_i32_1 = arith.constant 0 : i32
    return %arg0, %c0_i32, %c0_i32_0 : i32, i32, i32
  }
  func.func @transform_5(%arg0: i32) -> (i32, i32) {
    %c0_i32 = arith.constant 0 : i32
    %c0_i32_0 = arith.constant 0 : i32
    return %arg0, %c0_i32 : i32, i32
  }
  func.func @transform_6(%arg0: i32) -> (i32, i32, i32) {
    %c0_i32 = arith.constant 0 : i32
    %c0_i32_0 = arith.constant 0 : i32
    %c0_i32_1 = arith.constant 0 : i32
    return %arg0, %c0_i32, %c0_i32_0 : i32, i32, i32
  }
}

</mosaic_0001>

<llo_original>
// kernel: tpu_custom_call.1
$region0: #{tpu_custom_call.1}
  #allocation0 [shape = 'u32[]', space=smem, size = 0x4, offset = 0x4, fixed_abs, tag = 'smem constant byte address 0x4 - core index']
  #allocation1 [shape = 'u32[144,128]{1,0:T(1,128)}', space=vmem, size = 0x12000, scoped, tag = 'internal scratch']
  %s0 = inlined_call_operand.vmem [shape: bf16[2,2,2,9,9,4], index: 0, kind: input, shape index: {}]
  %s1 = inlined_call_operand.vmem [shape: bf16[3,3,4,8], index: 1, kind: input, shape index: {}]
  %s2 = inlined_call_operand.vmem [shape: bf16[4,8], index: 2, kind: input, shape index: {}]
  %s3 = inlined_call_operand.vmem [shape: bf16[128,8], index: 3, kind: output, shape index: {0}]
  %s4 = inlined_call_operand.hbm [shape: f32[2,2,8], index: 4, kind: output, shape index: {1}]
  %s5 = inlined_call_operand.vmem [shape: bf16[128,8], index: 5, kind: output, shape index: {2}]
  %s6 = inlined_call_operand.hbm [shape: f32[2,2,8], index: 6, kind: output, shape index: {3}]
  %7 = xla_tuple %s3, %s4, %s5, %s6
  %s8 = sld [smem:[#allocation0]]
  $region69: #{tpu_custom_call.1} parent=0
    _
  %s10 = ssub.s32 1, %s8
  %s11 = scalar_select 0, %s10, %s8
  $region1: #{tpu_custom_call.1} parent=0
    #allocation2 [shape = 'u8[2048]{0}', space=vmem, size = 0x800, scoped, tag = 'output window, operand 1']
    #allocation3 [shape = 's32[2]{0}', space=sflag, size = 0x8, scoped, tag = 'scoped memory for tpu_custom_call.1']
    #allocation4 [shape = 'u8[2048]{0}', space=vmem, size = 0x800, scoped, tag = 'output window, operand 3']
    #allocation5 [shape = 's32[2]{0}', space=sflag, size = 0x8, scoped, tag = 'scoped memory for tpu_custom_call.1']
    %12 = vsyncpa [#allocation3], 0
    %s13 = scalar_lea.sflag [#allocation3], 1
    %14 = vsyncpa %s13, 0
    %15 = vsyncpa [#allocation5], 0
    %s16 = scalar_lea.sflag [#allocation5], 1
    %17 = vsyncpa %s16, 0
    loop: start=0, step=1, limit=4
    $region2: #{tpu_custom_call.1} parent=1 // loop_pre_header
      _
    $region3: #{tpu_custom_call.1} parent=1 // loop_header
      %s19 = sphi 0, %s23
      %p20 = scmp.ge.s32.totalorder %s19, 4
      %s29 = sphi 0, %s31
      %s32 = sphi 0, %s29
      %s33 = sphi 0, %s32
      %s49 = sphi 0, %s33
      %s53 = sphi 0, %s53
      %s55 = sphi 0, %s53
      %s56 = sphi 0, %s55
      %s70 = sphi 0, %s56
      %s74 = sphi 0, %s74
      %s76 = sphi 0, %s74
      %s77 = sphi 0, %s76
      %s91 = sphi 0, %s77
      %s97 = sphi 0, %s99
      %s100 = sphi 0, %s97
      %s101 = sphi 0, %s100
      %s117 = sphi 0, %s101
      %s123 = sphi 0, %s125
      %s126 = sphi 0, %s123
      %s127 = sphi 0, %s126
      %s143 = sphi 0, %s127
      %s149 = sphi 0, %s151
      %s152 = sphi 0, %s149
      %s153 = sphi 0, %s152
      %s169 = sphi 0, %s153
      %s175 = sphi 0, %s177
      %s178 = sphi 0, %s175
      %s179 = sphi 0, %s178
      %s195 = sphi 0, %s179
    $region4: #{tpu_custom_call.1} parent=1 // loop_header_branch
      %22 = sbr.rel (%p20) target = $region8
    $region5: #{tpu_custom_call.1} parent=1 // loop_body
      %s24 = ssub.s32 %s19, 1
      %s25 = ssub.s32 %s19, 2
      %s26 = sadd.s32 %s19, 1
      %s27 = ssub.s32 %s19, %s26
      %p28 = scmp.eq.s32.totalorder %s27, 0
      %s30 = sadd.s32 %s29, 1
      %s31 = scalar_select %p28, %s29, %s30
      %p34 = pneg %p28
      %p35 = scmp.eq.s32.totalorder %s19, 1
      %p36 = por %p34, %p35
      %p37 = scmp.ne.s32.totalorder %s29, %s32
      %p38 = scmp.eq.s32.totalorder %s19, 0
      %p39 = por %p37, %p38
      %p40 = scmp.ne.s32.totalorder %s29, %s32
      %p41 = scmp.eq.s32.totalorder %s24, 1
      %p42 = por %p40, %p41
      %p43 = scmp.ne.s32.totalorder %s32, %s33
      %p44 = scmp.eq.s32.totalorder %s24, 0
      %p45 = por %p43, %p44
      %p46 = scmp.ne.s32.totalorder %s32, %s33
      %p47 = scmp.eq.s32.totalorder %s25, 1
      %p48 = por %p46, %p47
      %p50 = scmp.ne.s32.totalorder %s33, %s49
      %p51 = scmp.eq.s32.totalorder %s25, 0
      %p52 = por %p50, %p51
      %s54 = sadd.s32 %s53, 1
      %p57 = scmp.eq.s32.totalorder %s19, 1
      %p58 = scmp.ne.s32.totalorder %s53, %s55
      %p59 = scmp.eq.s32.totalorder %s19, 0
      %p60 = por %p58, %p59
      %p61 = scmp.ne.s32.totalorder %s53, %s55
      %p62 = scmp.eq.s32.totalorder %s24, 1
      %p63 = por %p61, %p62
      %p64 = scmp.ne.s32.totalorder %s55, %s56
      %p65 = scmp.eq.s32.totalorder %s24, 0
      %p66 = por %p64, %p65
      %p67 = scmp.ne.s32.totalorder %s55, %s56
      %p68 = scmp.eq.s32.totalorder %s25, 1
      %p69 = por %p67, %p68
      %p71 = scmp.ne.s32.totalorder %s56, %s70
      %p72 = scmp.eq.s32.totalorder %s25, 0
      %p73 = por %p71, %p72
      %s75 = sadd.s32 %s74, 1
      %p78 = scmp.eq.s32.totalorder %s19, 1
      %p79 = scmp.ne.s32.totalorder %s74, %s76
      %p80 = scmp.eq.s32.totalorder %s19, 0
      %p81 = por %p79, %p80
      %p82 = scmp.ne.s32.totalorder %s74, %s76
      %p83 = scmp.eq.s32.totalorder %s24, 1
      %p84 = por %p82, %p83
      %p85 = scmp.ne.s32.totalorder %s76, %s77
      %p86 = scmp.eq.s32.totalorder %s24, 0
      %p87 = por %p85, %p86
      %p88 = scmp.ne.s32.totalorder %s76, %s77
      %p89 = scmp.eq.s32.totalorder %s25, 1
      %p90 = por %p88, %p89
      %p92 = scmp.ne.s32.totalorder %s77, %s91
      %p93 = scmp.eq.s32.totalorder %s25, 0
      %p94 = por %p92, %p93
      %s95 = ssub.s32 %s19, %s26
      %p96 = scmp.eq.s32.totalorder %s95, 0
      %s98 = sadd.s32 %s97, 1
      %s99 = scalar_select %p96, %s97, %s98
      %p102 = pneg %p96
      %p103 = scmp.eq.s32.totalorder %s19, 1
      %p104 = por %p102, %p103
      %p105 = scmp.ne.s32.totalorder %s97, %s100
      %p106 = scmp.eq.s32.totalorder %s19, 0
      %p107 = por %p105, %p106
      %p108 = scmp.ne.s32.totalorder %s97, %s100
      %p109 = scmp.eq.s32.totalorder %s24, 1
      %p110 = por %p108, %p109
      %p111 = scmp.ne.s32.totalorder %s100, %s101
      %p112 = scmp.eq.s32.totalorder %s24, 0
      %p113 = por %p111, %p112
      %p114 = scmp.ne.s32.totalorder %s100, %s101
      %p115 = scmp.eq.s32.totalorder %s25, 1
      %p116 = por %p114, %p115
      %p118 = scmp.ne.s32.totalorder %s101, %s117
      %p119 = scmp.eq.s32.totalorder %s25, 0
      %p120 = por %p118, %p119
      %s121 = ssub.s32 %s19, %s26
      %p122 = scmp.eq.s32.totalorder %s121, 0
      %s124 = sadd.s32 %s123, 1
      %s125 = scalar_select %p122, %s123, %s124
      %p128 = pneg %p122
      %p129 = scmp.eq.s32.totalorder %s19, 1
      %p130 = por %p128, %p129
      %p131 = scmp.ne.s32.totalorder %s123, %s126
      %p132 = scmp.eq.s32.totalorder %s19, 0
      %p133 = por %p131, %p132
      %p134 = scmp.ne.s32.totalorder %s123, %s126
      %p135 = scmp.eq.s32.totalorder %s24, 1
      %p136 = por %p134, %p135
      %p137 = scmp.ne.s32.totalorder %s126, %s127
      %p138 = scmp.eq.s32.totalorder %s24, 0
      %p139 = por %p137, %p138
      %p140 = scmp.ne.s32.totalorder %s126, %s127
      %p141 = scmp.eq.s32.totalorder %s25, 1
      %p142 = por %p140, %p141
      %p144 = scmp.ne.s32.totalorder %s127, %s143
      %p145 = scmp.eq.s32.totalorder %s25, 0
      %p146 = por %p144, %p145
      %s147 = ssub.s32 %s19, %s26
      %p148 = scmp.eq.s32.totalorder %s147, 0
      %s150 = sadd.s32 %s149, 1
      %s151 = scalar_select %p148, %s149, %s150
      %p154 = pneg %p148
      %p155 = scmp.eq.s32.totalorder %s19, 1
      %p156 = por %p154, %p155
      %p157 = scmp.ne.s32.totalorder %s149, %s152
      %p158 = scmp.eq.s32.totalorder %s19, 0
      %p159 = por %p157, %p158
      %p160 = scmp.ne.s32.totalorder %s149, %s152
      %p161 = scmp.eq.s32.totalorder %s24, 1
      %p162 = por %p160, %p161
      %p163 = scmp.ne.s32.totalorder %s152, %s153
      %p164 = scmp.eq.s32.totalorder %s24, 0
      %p165 = por %p163, %p164
      %p166 = scmp.ne.s32.totalorder %s152, %s153
      %p167 = scmp.eq.s32.totalorder %s25, 1
      %p168 = por %p166, %p167
      %p170 = scmp.ne.s32.totalorder %s153, %s169
      %p171 = scmp.eq.s32.totalorder %s25, 0
      %p172 = por %p170, %p171
      %s173 = ssub.s32 %s19, %s26
      %p174 = scmp.eq.s32.totalorder %s173, 0
      %s176 = sadd.s32 %s175, 1
      %s177 = scalar_select %p174, %s175, %s176
      %p180 = pneg %p174
      %p181 = scmp.eq.s32.totalorder %s19, 1
      %p182 = por %p180, %p181
      %p183 = scmp.ne.s32.totalorder %s175, %s178
      %p184 = scmp.eq.s32.totalorder %s19, 0
      %p185 = por %p183, %p184
      %p186 = scmp.ne.s32.totalorder %s175, %s178
      %p187 = scmp.eq.s32.totalorder %s24, 1
      %p188 = por %p186, %p187
      %p189 = scmp.ne.s32.totalorder %s178, %s179
      %p190 = scmp.eq.s32.totalorder %s24, 0
      %p191 = por %p189, %p190
      %p192 = scmp.ne.s32.totalorder %s178, %s179
      %p193 = scmp.eq.s32.totalorder %s25, 1
      %p194 = por %p192, %p193
      %p196 = scmp.ne.s32.totalorder %s179, %s195
      %p197 = scmp.eq.s32.totalorder %s25, 0
      %p198 = por %p196, %p197
      %p199 = scmp.le.s32.totalorder 1, %s19
      %p200 = scmp.lt.s32.totalorder %s19, 3
      %p201 = pnand %p199, %p200
      %p202 = pneg %p201
      // Predicated region
      $region9: #{tpu_custom_call.1} parent=5 // pred_check
        _
      $region10: #{tpu_custom_call.1} parent=5 // pred_check_branch
        %204 = sbr.rel (%p201) target = $region12
      $region11: #{tpu_custom_call.1} parent=5 // pred_region
        %s205 = ssub.s32 %s19, 1
        // Predicated region
        $region13: #{tpu_custom_call.1} parent=11 // pred_check
          %p206 = pneg %p66
        $region14: #{tpu_custom_call.1} parent=11 // pred_check_branch
          %208 = sbr.rel (%p206) target = $region16
        $region15: #{tpu_custom_call.1} parent=11 // pred_region
          _
        $region16: #{tpu_custom_call.1} parent=11 // pred_fallthru
          _
        // Predicated region
        $region17: #{tpu_custom_call.1} parent=11 // pred_check
          %p209 = pneg %p87
        $region18: #{tpu_custom_call.1} parent=11 // pred_check_branch
          %211 = sbr.rel (%p209) target = $region20
        $region19: #{tpu_custom_call.1} parent=11 // pred_region
          _
        $region20: #{tpu_custom_call.1} parent=11 // pred_fallthru
          _
      $region12: #{tpu_custom_call.1} parent=5 // pred_fallthru
        _
      %p212 = scmp.lt.s32.totalorder %s19, 2
      // Predicated region
      $region21: #{tpu_custom_call.1} parent=5 // pred_check
        %p213 = pneg %p212
      $region22: #{tpu_custom_call.1} parent=5 // pred_check_branch
        %215 = sbr.rel (%p213) target = $region24
      $region23: #{tpu_custom_call.1} parent=5 // pred_region
        // Predicated region
        $region25: #{tpu_custom_call.1} parent=23 // pred_check
          %p216 = pneg %p39
        $region26: #{tpu_custom_call.1} parent=23 // pred_check_branch
          %218 = sbr.rel (%p216) target = $region28
        $region27: #{tpu_custom_call.1} parent=23 // pred_region
          %p219 = scmp.lt.s32.totalorder %s19, 1
          %s220 = scalar_select %p219, %s19, 1
          %s221 = smul.addr %s220, 72
          %s222 = smul.addr %s221, 4
          %s223 = scalar_lea.vmem %s0, %s222
        $region28: #{tpu_custom_call.1} parent=23 // pred_fallthru
          _
      $region24: #{tpu_custom_call.1} parent=5 // pred_fallthru
        _
      %p224 = scmp.le.s32.totalorder 1, %s19
      %p225 = scmp.lt.s32.totalorder %s19, 3
      %p226 = pnand %p224, %p225
      %p227 = pneg %p226
      // Predicated region
      $region29: #{tpu_custom_call.1} parent=5 // pred_check
        _
      $region30: #{tpu_custom_call.1} parent=5 // pred_check_branch
        %229 = sbr.rel (%p226) target = $region32
      $region31: #{tpu_custom_call.1} parent=5 // pred_region
        %s230 = ssub.s32 %s19, 1
        %p231 = scmp.lt.s32.totalorder %s24, 1
        %s232 = scalar_select %p231, %s24, 1
        %s233 = smul.addr %s232, 72
        %s234 = smul.addr %s233, 4
        %s235 = scalar_lea.vmem %s0, %s234
        %p236 = pneg %p45
        %p237 = pneg %p42
        %p238 = pneg %p66
        %p239 = pneg %p63
        %p240 = pneg %p87
        %p241 = pneg %p84
        %p242 = pneg %p113
        %p243 = pneg %p110
        %s244 = smul.u32 8, %s24
        %p245 = scmp.lt.s32.totalorder %s244, 15
        %s246 = scalar_select %p245, %s244, 15
        %s247 = smul.addr %s246, 4
        %s248 = scalar_lea.vmem %s3, %s247
        %p249 = pneg %p139
        %p250 = pneg %p136
        %s251 = sand.u32 %s126, 1
        %s252 = scalar_lea.sflag [#allocation3], %s251
        %s253 = sand.u32 %s126, 1
        %s254 = smul.addr %s253, 2
        %s255 = scalar_lea.vmem [#allocation2], %s254
        %p256 = pneg %p165
        %p257 = pneg %p162
        %s258 = smul.u32 8, %s24
        %p259 = scmp.lt.s32.totalorder %s258, 15
        %s260 = scalar_select %p259, %s258, 15
        %s261 = smul.addr %s260, 4
        %s262 = scalar_lea.vmem %s5, %s261
        %p263 = pneg %p191
        %p264 = pneg %p188
        %s265 = sand.u32 %s178, 1
        %s266 = scalar_lea.sflag [#allocation5], %s265
        %s267 = sand.u32 %s178, 1
        %s268 = smul.addr %s267, 2
        %s269 = scalar_lea.vmem [#allocation4], %s268
        %p270 = scmp.lt.s32.totalorder %s24, 1
        %s271 = scalar_select %p270, %s24, 1
        %s272 = smul.addr %s271, 72
        %s273 = smul.addr %s272, 4
        %s274 = scalar_lea.vmem %s0, %s273
        %s275 = smul.u32 8, %s24
        %p276 = scmp.lt.s32.totalorder %s275, 15
        %s277 = scalar_select %p276, %s275, 15
        %s278 = smul.addr %s277, 4
        %s279 = scalar_lea.vmem %s3, %s278
        %s280 = smul.u32 8, %s24
        %s281 = smul.u32 8, %s24
        %p282 = scmp.lt.s32.totalorder %s281, 15
        %s283 = scalar_select %p282, %s281, 15
        %s284 = smul.addr %s283, 4
        %s285 = scalar_lea.vmem %s5, %s284
        %s286 = smul.u32 8, %s24
        %v288 = vld [vmem:[%s274] sm:$0xf]
        %v289 = vld [vmem:[%s274 + $0x8] sm:$0xf]
        %v290 = vld [vmem:[%s274 + $0x10] sm:$0xf]
        %v291 = vld [vmem:[%s274 + $0x18] sm:$0xf]
        %v292 = vld [vmem:[%s274 + $0x20] sm:$0xf]
        %v293 = vld [vmem:[%s274 + $0x28] sm:$0xf]
        %v294 = vld [vmem:[%s274 + $0x30] sm:$0xf]
        %v295 = vld [vmem:[%s274 + $0x38] sm:$0xf]
        %v296 = vld [vmem:[%s1] sm:$0x3]
        %s297 = scalar_lea.vmem %s274, 72
        %v298 = vld [vmem:[%s297] sm:$0xf]
        %v299 = vld [vmem:[%s297 + $0x8] sm:$0xf]
        %v300 = vld [vmem:[%s297 + $0x10] sm:$0xf]
        %v301 = vld [vmem:[%s297 + $0x18] sm:$0xf]
        %v302 = vld [vmem:[%s297 + $0x20] sm:$0xf]
        %v303 = vld [vmem:[%s297 + $0x28] sm:$0xf]
        %v304 = vld [vmem:[%s297 + $0x30] sm:$0xf]
        %v305 = vld [vmem:[%s297 + $0x38] sm:$0xf]
        %s306 = scalar_lea.vmem %s1, 2
        %v307 = vld [vmem:[%s306] sm:$0x3]
        %v316 = vunpack.c.l.b16 %v298
        %v317 = vunpack.c.l.b16 %v299
        %v318 = vunpack.c.l.b16 %v300
        %v319 = vunpack.c.l.b16 %v301
        %v320 = vunpack.c.l.b16 %v302
        %v321 = vunpack.c.l.b16 %v303
        %v322 = vunpack.c.l.b16 %v304
        %v323 = vunpack.c.l.b16 %v305
        %v324 = vpack.c.b16 %v317, %v316
        %v325 = vpack.c.b16 %v319, %v318
        %v326 = vpack.c.b16 %v321, %v320
        %v327 = vpack.c.b16 %v323, %v322
        %vm328 = vcmask 31744
        %v330 = vsel %vm328, %v324, 0
        %v333 = vsel %vm328, %v325, 0
        %v336 = vsel %vm328, %v326, 0
        %v339 = vsel %vm328, %v327, 0
        %vm341 = vcmask 1041408
        %v343 = vsel %vm341, %v307, 0
        %345 = vmatprep.subr.bf16.mxu0 0
        %346 = vmatpush1.bf16.msra.mxu0 0
        %347 = vmatprep.subr.bf16.mxu0 0
        %348 = vmatpush1.bf16.msra.mxu0 0
        %349 = vmatprep.subr.bf16.mxu0 0
        %350 = vmatpush1.bf16.msra.mxu0 0
        %351 = vmatprep.subr.bf16.mxu0 0
        %352 = vmatpush1.bf16.msra.mxu0 0
        %353 = vmatprep.subr.bf16.mxu0 0
        %354 = vmatpush1.bf16.msra.mxu0 0
        %355 = vmatprep.subr.bf16.mxu0 0
        %356 = vmatpush1.bf16.msra.mxu0 0
        %357 = vmatprep.subr.bf16.mxu0 0
        %358 = vmatpush1.bf16.msra.mxu0 0
        %359 = vmatprep.subr.bf16.mxu0 0
        %360 = vmatpush1.bf16.msra.mxu0 %v343
        %361 = vmatprep.subr.bf16.mxu0 0
        %362 = vmatpush2.bf16.msra.mxu0 0
        %363 = vmatprep.subr.bf16.mxu0 0
        %364 = vmatpush2.bf16.msra.mxu0 0
        %365 = vmatprep.subr.bf16.mxu0 0
        %366 = vmatpush2.bf16.msra.mxu0 0
        %367 = vmatprep.subr.bf16.mxu0 0
        %368 = vmatpush2.bf16.msra.mxu0 0
        %369 = vmatprep.subr.bf16.mxu0 0
        %370 = vmatpush2.bf16.msra.mxu0 0
        %371 = vmatprep.subr.bf16.mxu0 0
        %372 = vmatpush2.bf16.msra.mxu0 0
        %373 = vmatprep.subr.bf16.mxu0 0
        %374 = vmatpush2.bf16.msra.mxu0 0
        %375 = vmatprep.subr.bf16.mxu0 0
        %376 = vmatpush2.bf16.msra.mxu0 0
        %377 = vmatprep.mubr.bf16.mxu0 0
        %378 = vmatmul.mubr.bf16.gmra.mxu0 %v330
        %v379 = vpop.f32.mrf.mxu0
        %v380 = vadd.f32 0.0, %v379
        %v381 = vpop.f32.mrf.mxu0
        %v382 = vpop.f32.mrf.mxu0
        %v383 = vadd.f32 0.0, %v382
        %v384 = vpop.f32.mrf.mxu0
        %385 = vmatprep.mubr.bf16.mxu0 0
        %386 = vmatmul.mubr.bf16.gmra.mxu0 %v333
        %v387 = vpop.f32.mrf.mxu0
        %v388 = vadd.f32 0.0, %v387
        %v389 = vpop.f32.mrf.mxu0
        %v390 = vpop.f32.mrf.mxu0
        %v391 = vadd.f32 0.0, %v390
        %v392 = vpop.f32.mrf.mxu0
        %393 = vmatprep.mubr.bf16.mxu0 0
        %394 = vmatmul.mubr.bf16.gmra.mxu0 %v336
        %v395 = vpop.f32.mrf.mxu0
        %v396 = vadd.f32 0.0, %v395
        %v397 = vpop.f32.mrf.mxu0
        %v398 = vpop.f32.mrf.mxu0
        %v399 = vadd.f32 0.0, %v398
        %v400 = vpop.f32.mrf.mxu0
        %401 = vmatprep.mubr.bf16.mxu0 0
        %402 = vmatmul.mubr.bf16.gmra.mxu0 %v339
        %v403 = vpop.f32.mrf.mxu0
        %v404 = vadd.f32 0.0, %v403
        %v405 = vpop.f32.mrf.mxu0
        %v406 = vpop.f32.mrf.mxu0
        %v407 = vadd.f32 0.0, %v406
        %v408 = vpop.f32.mrf.mxu0
        %409 = vdwg.mxu0
        %v418 = vunpack.c.l.b16 %v288
        %v419 = vunpack.c.l.b16 %v289
        %v420 = vunpack.c.l.b16 %v290
        %v421 = vunpack.c.l.b16 %v291
        %v422 = vunpack.c.l.b16 %v292
        %v423 = vunpack.c.l.b16 %v293
        %v424 = vunpack.c.l.b16 %v294
        %v425 = vunpack.c.l.b16 %v295
        %v426 = vpack.c.b16 %v419, %v418
        %v427 = vpack.c.b16 %v421, %v420
        %v428 = vpack.c.b16 %v423, %v422
        %v429 = vpack.c.b16 %v425, %v424
        %v431 = vsel %vm328, %v426, 0
        %v434 = vsel %vm328, %v427, 0
        %v437 = vsel %vm328, %v428, 0
        %v440 = vsel %vm328, %v429, 0
        %v443 = vsel %vm341, %v296, 0
        %445 = vmatprep.subr.bf16.mxu0 0
        %446 = vmatpush1.bf16.msra.mxu0 0
        %447 = vmatprep.subr.bf16.mxu0 0
        %448 = vmatpush1.bf16.msra.mxu0 0
        %449 = vmatprep.subr.bf16.mxu0 0
        %450 = vmatpush1.bf16.msra.mxu0 0
        %451 = vmatprep.subr.bf16.mxu0 0
        %452 = vmatpush1.bf16.msra.mxu0 0
        %453 = vmatprep.subr.bf16.mxu0 0
        %454 = vmatpush1.bf16.msra.mxu0 0
        %455 = vmatprep.subr.bf16.mxu0 0
        %456 = vmatpush1.bf16.msra.mxu0 0
        %457 = vmatprep.subr.bf16.mxu0 0
        %458 = vmatpush1.bf16.msra.mxu0 0
        %459 = vmatprep.subr.bf16.mxu0 0
        %460 = vmatpush1.bf16.msra.mxu0 %v443
        %461 = vmatprep.subr.bf16.mxu0 0
        %462 = vmatpush2.bf16.msra.mxu0 0
        %463 = vmatprep.subr.bf16.mxu0 0
        %464 = vmatpush2.bf16.msra.mxu0 0
        %465 = vmatprep.subr.bf16.mxu0 0
        %466 = vmatpush2.bf16.msra.mxu0 0
        %467 = vmatprep.subr.bf16.mxu0 0
        %468 = vmatpush2.bf16.msra.mxu0 0
        %469 = vmatprep.subr.bf16.mxu0 0
        %470 = vmatpush2.bf16.msra.mxu0 0
        %471 = vmatprep.subr.bf16.mxu0 0
        %472 = vmatpush2.bf16.msra.mxu0 0
        %473 = vmatprep.subr.bf16.mxu0 0
        %474 = vmatpush2.bf16.msra.mxu0 0
        %475 = vmatprep.subr.bf16.mxu0 0
        %476 = vmatpush2.bf16.msra.mxu0 0
        %477 = vmatprep.mubr.bf16.mxu0 0
        %478 = vmatmul.mubr.bf16.gmra.mxu0 %v431
        %v479 = vpop.f32.mrf.mxu0
        %v480 = vadd.f32 %v380, %v479
        %v481 = vpop.f32.mrf.mxu0
        %v482 = vpop.f32.mrf.mxu0
        %v483 = vadd.f32 %v383, %v482
        %v484 = vpop.f32.mrf.mxu0
        %485 = vmatprep.mubr.bf16.mxu0 0
        %486 = vmatmul.mubr.bf16.gmra.mxu0 %v434
        %v487 = vpop.f32.mrf.mxu0
        %v488 = vadd.f32 %v388, %v487
        %v489 = vpop.f32.mrf.mxu0
        %v490 = vpop.f32.mrf.mxu0
        %v491 = vadd.f32 %v391, %v490
        %v492 = vpop.f32.mrf.mxu0
        %493 = vmatprep.mubr.bf16.mxu0 0
        %494 = vmatmul.mubr.bf16.gmra.mxu0 %v437
        %v495 = vpop.f32.mrf.mxu0
        %v496 = vadd.f32 %v396, %v495
        %v497 = vpop.f32.mrf.mxu0
        %v498 = vpop.f32.mrf.mxu0
        %v499 = vadd.f32 %v399, %v498
        %v500 = vpop.f32.mrf.mxu0
        %501 = vmatprep.mubr.bf16.mxu0 0
        %502 = vmatmul.mubr.bf16.gmra.mxu0 %v440
        %v503 = vpop.f32.mrf.mxu0
        %v504 = vadd.f32 %v404, %v503
        %v505 = vpop.f32.mrf.mxu0
        %v506 = vpop.f32.mrf.mxu0
        %v507 = vadd.f32 %v407, %v506
        %v508 = vpop.f32.mrf.mxu0
        %509 = vdwg.mxu0
        %v510 = vld [vmem:[%s274] sm:$0xf]
        %v511 = vld [vmem:[%s274 + $0x4] sm:$0x1]
        %v512 = vld [vmem:[%s274 + $0x8] sm:$0xf]
        %v513 = vld [vmem:[%s274 + $0xc] sm:$0x1]
        %v514 = vld [vmem:[%s274 + $0x10] sm:$0xf]
        %v515 = vld [vmem:[%s274 + $0x14] sm:$0x1]
        %v516 = vld [vmem:[%s274 + $0x18] sm:$0xf]
        %v517 = vld [vmem:[%s274 + $0x1c] sm:$0x1]
        %v518 = vld [vmem:[%s274 + $0x20] sm:$0xf]
        %v519 = vld [vmem:[%s274 + $0x24] sm:$0x1]
        %v520 = vld [vmem:[%s274 + $0x28] sm:$0xf]
        %v521 = vld [vmem:[%s274 + $0x2c] sm:$0x1]
        %v522 = vld [vmem:[%s274 + $0x30] sm:$0xf]
        %v523 = vld [vmem:[%s274 + $0x34] sm:$0x1]
        %v524 = vld [vmem:[%s274 + $0x38] sm:$0xf]
        %v525 = vld [vmem:[%s274 + $0x3c] sm:$0x1]
        %vm526 = vsmask.f32 3328
        %vm527 = vsmask.f32 7440
        %vm528 = vmor %vm526, %vm527
        %v530 = vshrl.u32 %v510, 16
        %v532 = vrot.slane %v530, 4
        %v533 = vshll.u32 %v510, 16
        %v535 = vrot.slane %v533, 5
        %v536 = vor.u32 %v532, %v535
        %v537 = vrot.slane %v536, 4
        %v539 = vshll.u32 %v511, 16
        %v541 = vrot.slane %v539, 5
        %v542 = vsel %vm528, %v537, %v541
        %v544 = vshrl.u32 %v512, 16
        %v546 = vrot.slane %v544, 4
        %v547 = vshll.u32 %v512, 16
        %v549 = vrot.slane %v547, 5
        %v550 = vor.u32 %v546, %v549
        %v551 = vrot.slane %v550, 4
        %v553 = vshll.u32 %v513, 16
        %v555 = vrot.slane %v553, 5
        %v556 = vsel %vm528, %v551, %v555
        %v558 = vshrl.u32 %v514, 16
        %v560 = vrot.slane %v558, 4
        %v561 = vshll.u32 %v514, 16
        %v563 = vrot.slane %v561, 5
        %v564 = vor.u32 %v560, %v563
        %v565 = vrot.slane %v564, 4
        %v567 = vshll.u32 %v515, 16
        %v569 = vrot.slane %v567, 5
        %v570 = vsel %vm528, %v565, %v569
        %v572 = vshrl.u32 %v516, 16
        %v574 = vrot.slane %v572, 4
        %v575 = vshll.u32 %v516, 16
        %v577 = vrot.slane %v575, 5
        %v578 = vor.u32 %v574, %v577
        %v579 = vrot.slane %v578, 4
        %v581 = vshll.u32 %v517, 16
        %v583 = vrot.slane %v581, 5
        %v584 = vsel %vm528, %v579, %v583
        %v586 = vshrl.u32 %v518, 16
        %v588 = vrot.slane %v586, 4
        %v589 = vshll.u32 %v518, 16
        %v591 = vrot.slane %v589, 5
        %v592 = vor.u32 %v588, %v591
        %v593 = vrot.slane %v592, 4
        %v595 = vshll.u32 %v519, 16
        %v597 = vrot.slane %v595, 5
        %v598 = vsel %vm528, %v593, %v597
        %v600 = vshrl.u32 %v520, 16
        %v602 = vrot.slane %v600, 4
        %v603 = vshll.u32 %v520, 16
        %v605 = vrot.slane %v603, 5
        %v606 = vor.u32 %v602, %v605
        %v607 = vrot.slane %v606, 4
        %v609 = vshll.u32 %v521, 16
        %v611 = vrot.slane %v609, 5
        %v612 = vsel %vm528, %v607, %v611
        %v614 = vshrl.u32 %v522, 16
        %v616 = vrot.slane %v614, 4
        %v617 = vshll.u32 %v522, 16
        %v619 = vrot.slane %v617, 5
        %v620 = vor.u32 %v616, %v619
        %v621 = vrot.slane %v620, 4
        %v623 = vshll.u32 %v523, 16
        %v625 = vrot.slane %v623, 5
        %v626 = vsel %vm528, %v621, %v625
        %v628 = vshrl.u32 %v524, 16
        %v630 = vrot.slane %v628, 4
        %v631 = vshll.u32 %v524, 16
        %v633 = vrot.slane %v631, 5
        %v634 = vor.u32 %v630, %v633
        %v635 = vrot.slane %v634, 4
        %v637 = vshll.u32 %v525, 16
        %v639 = vrot.slane %v637, 5
        %v640 = vsel %vm528, %v635, %v639
        %s641 = scalar_lea.vmem %s1, 4
        %v642 = vld [vmem:[%s641] sm:$0x3]
        %v643 = vunpack.c.l.b16 %v542
        %v644 = vunpack.c.l.b16 %v556
        %v645 = vunpack.c.l.b16 %v570
        %v646 = vunpack.c.l.b16 %v584
        %v647 = vunpack.c.l.b16 %v598
        %v648 = vunpack.c.l.b16 %v612
        %v649 = vunpack.c.l.b16 %v626
        %v650 = vunpack.c.l.b16 %v640
        %v651 = vpack.c.b16 %v644, %v643
        %v652 = vpack.c.b16 %v646, %v645
        %v653 = vpack.c.b16 %v648, %v647
        %v654 = vpack.c.b16 %v650, %v649
        %v656 = vsel %vm328, %v651, 0
        %v659 = vsel %vm328, %v652, 0
        %v662 = vsel %vm328, %v653, 0
        %v665 = vsel %vm328, %v654, 0
        %v668 = vsel %vm341, %v642, 0
        %670 = vmatprep.subr.bf16.mxu0 0
        %671 = vmatpush1.bf16.msra.mxu0 0
        %672 = vmatprep.subr.bf16.mxu0 0
        %673 = vmatpush1.bf16.msra.mxu0 0
        %674 = vmatprep.subr.bf16.mxu0 0
        %675 = vmatpush1.bf16.msra.mxu0 0
        %676 = vmatprep.subr.bf16.mxu0 0
        %677 = vmatpush1.bf16.msra.mxu0 0
        %678 = vmatprep.subr.bf16.mxu0 0
        %679 = vmatpush1.bf16.msra.mxu0 0
        %680 = vmatprep.subr.bf16.mxu0 0
        %681 = vmatpush1.bf16.msra.mxu0 0
        %682 = vmatprep.subr.bf16.mxu0 0
        %683 = vmatpush1.bf16.msra.mxu0 0
        %684 = vmatprep.subr.bf16.mxu0 0
        %685 = vmatpush1.bf16.msra.mxu0 %v668
        %686 = vmatprep.subr.bf16.mxu0 0
        %687 = vmatpush2.bf16.msra.mxu0 0
        %688 = vmatprep.subr.bf16.mxu0 0
        %689 = vmatpush2.bf16.msra.mxu0 0
        %690 = vmatprep.subr.bf16.mxu0 0
        %691 = vmatpush2.bf16.msra.mxu0 0
        %692 = vmatprep.subr.bf16.mxu0 0
        %693 = vmatpush2.bf16.msra.mxu0 0
        %694 = vmatprep.subr.bf16.mxu0 0
        %695 = vmatpush2.bf16.msra.mxu0 0
        %696 = vmatprep.subr.bf16.mxu0 0
        %697 = vmatpush2.bf16.msra.mxu0 0
        %698 = vmatprep.subr.bf16.mxu0 0
        %699 = vmatpush2.bf16.msra.mxu0 0
        %700 = vmatprep.subr.bf16.mxu0 0
        %701 = vmatpush2.bf16.msra.mxu0 0
        %702 = vmatprep.mubr.bf16.mxu0 0
        %703 = vmatmul.mubr.bf16.gmra.mxu0 %v656
        %v704 = vpop.f32.mrf.mxu0
        %v705 = vadd.f32 0.0, %v704
        %v706 = vpop.f32.mrf.mxu0
        %v707 = vpop.f32.mrf.mxu0
        %v708 = vadd.f32 0.0, %v707
        %v709 = vpop.f32.mrf.mxu0
        %710 = vmatprep.mubr.bf16.mxu0 0
        %711 = vmatmul.mubr.bf16.gmra.mxu0 %v659
        %v712 = vpop.f32.mrf.mxu0
        %v713 = vadd.f32 0.0, %v712
        %v714 = vpop.f32.mrf.mxu0
        %v715 = vpop.f32.mrf.mxu0
        %v716 = vadd.f32 0.0, %v715
        %v717 = vpop.f32.mrf.mxu0
        %718 = vmatprep.mubr.bf16.mxu0 0
        %719 = vmatmul.mubr.bf16.gmra.mxu0 %v662
        %v720 = vpop.f32.mrf.mxu0
        %v721 = vadd.f32 0.0, %v720
        %v722 = vpop.f32.mrf.mxu0
        %v723 = vpop.f32.mrf.mxu0
        %v724 = vadd.f32 0.0, %v723
        %v725 = vpop.f32.mrf.mxu0
        %726 = vmatprep.mubr.bf16.mxu0 0
        %727 = vmatmul.mubr.bf16.gmra.mxu0 %v665
        %v728 = vpop.f32.mrf.mxu0
        %v729 = vadd.f32 0.0, %v728
        %v730 = vpop.f32.mrf.mxu0
        %v731 = vpop.f32.mrf.mxu0
        %v732 = vadd.f32 0.0, %v731
        %v733 = vpop.f32.mrf.mxu0
        %734 = vdwg.mxu0
        %v735 = vadd.f32 %v480, %v705
        %v736 = vadd.f32 %v483, %v708
        %v737 = vadd.f32 %v488, %v713
        %v738 = vadd.f32 %v491, %v716
        %v739 = vadd.f32 %v496, %v721
        %v740 = vadd.f32 %v499, %v724
        %v741 = vadd.f32 %v504, %v729
        %v742 = vadd.f32 %v507, %v732
        %s743 = scalar_lea.vmem %s274, 144
        %v744 = vld [vmem:[%s743] sm:$0xf]
        %v745 = vld [vmem:[%s743 + $0x8] sm:$0xf]
        %v746 = vld [vmem:[%s743 + $0x10] sm:$0xf]
        %v747 = vld [vmem:[%s743 + $0x18] sm:$0xf]
        %v748 = vld [vmem:[%s743 + $0x20] sm:$0xf]
        %v749 = vld [vmem:[%s743 + $0x28] sm:$0xf]
        %v750 = vld [vmem:[%s743 + $0x30] sm:$0xf]
        %v751 = vld [vmem:[%s743 + $0x38] sm:$0xf]
        %s752 = scalar_lea.vmem %s1, 6
        %v753 = vld [vmem:[%s752] sm:$0x3]
        %v762 = vunpack.c.l.b16 %v744
        %v763 = vunpack.c.l.b16 %v745
        %v764 = vunpack.c.l.b16 %v746
        %v765 = vunpack.c.l.b16 %v747
        %v766 = vunpack.c.l.b16 %v748
        %v767 = vunpack.c.l.b16 %v749
        %v768 = vunpack.c.l.b16 %v750
        %v769 = vunpack.c.l.b16 %v751
        %v770 = vpack.c.b16 %v763, %v762
        %v771 = vpack.c.b16 %v765, %v764
        %v772 = vpack.c.b16 %v767, %v766
        %v773 = vpack.c.b16 %v769, %v768
        %v775 = vsel %vm328, %v770, 0
        %v778 = vsel %vm328, %v771, 0
        %v781 = vsel %vm328, %v772, 0
        %v784 = vsel %vm328, %v773, 0
        %v787 = vsel %vm341, %v753, 0
        %789 = vmatprep.subr.bf16.mxu0 0
        %790 = vmatpush1.bf16.msra.mxu0 0
        %791 = vmatprep.subr.bf16.mxu0 0
        %792 = vmatpush1.bf16.msra.mxu0 0
        %793 = vmatprep.subr.bf16.mxu0 0
        %794 = vmatpush1.bf16.msra.mxu0 0
        %795 = vmatprep.subr.bf16.mxu0 0
        %796 = vmatpush1.bf16.msra.mxu0 0
        %797 = vmatprep.subr.bf16.mxu0 0
        %798 = vmatpush1.bf16.msra.mxu0 0
        %799 = vmatprep.subr.bf16.mxu0 0
        %800 = vmatpush1.bf16.msra.mxu0 0
        %801 = vmatprep.subr.bf16.mxu0 0
        %802 = vmatpush1.bf16.msra.mxu0 0
        %803 = vmatprep.subr.bf16.mxu0 0
        %804 = vmatpush1.bf16.msra.mxu0 %v787
        %805 = vmatprep.subr.bf16.mxu0 0
        %806 = vmatpush2.bf16.msra.mxu0 0
        %807 = vmatprep.subr.bf16.mxu0 0
        %808 = vmatpush2.bf16.msra.mxu0 0
        %809 = vmatprep.subr.bf16.mxu0 0
        %810 = vmatpush2.bf16.msra.mxu0 0
        %811 = vmatprep.subr.bf16.mxu0 0
        %812 = vmatpush2.bf16.msra.mxu0 0
        %813 = vmatprep.subr.bf16.mxu0 0
        %814 = vmatpush2.bf16.msra.mxu0 0
        %815 = vmatprep.subr.bf16.mxu0 0
        %816 = vmatpush2.bf16.msra.mxu0 0
        %817 = vmatprep.subr.bf16.mxu0 0
        %818 = vmatpush2.bf16.msra.mxu0 0
        %819 = vmatprep.subr.bf16.mxu0 0
        %820 = vmatpush2.bf16.msra.mxu0 0
        %821 = vmatprep.mubr.bf16.mxu0 0
        %822 = vmatmul.mubr.bf16.gmra.mxu0 %v775
        %v823 = vpop.f32.mrf.mxu0
        %v824 = vadd.f32 0.0, %v823
        %v825 = vpop.f32.mrf.mxu0
        %v826 = vpop.f32.mrf.mxu0
        %v827 = vadd.f32 0.0, %v826
        %v828 = vpop.f32.mrf.mxu0
        %829 = vmatprep.mubr.bf16.mxu0 0
        %830 = vmatmul.mubr.bf16.gmra.mxu0 %v778
        %v831 = vpop.f32.mrf.mxu0
        %v832 = vadd.f32 0.0, %v831
        %v833 = vpop.f32.mrf.mxu0
        %v834 = vpop.f32.mrf.mxu0
        %v835 = vadd.f32 0.0, %v834
        %v836 = vpop.f32.mrf.mxu0
        %837 = vmatprep.mubr.bf16.mxu0 0
        %838 = vmatmul.mubr.bf16.gmra.mxu0 %v781
        %v839 = vpop.f32.mrf.mxu0
        %v840 = vadd.f32 0.0, %v839
        %v841 = vpop.f32.mrf.mxu0
        %v842 = vpop.f32.mrf.mxu0
        %v843 = vadd.f32 0.0, %v842
        %v844 = vpop.f32.mrf.mxu0
        %845 = vmatprep.mubr.bf16.mxu0 0
        %846 = vmatmul.mubr.bf16.gmra.mxu0 %v784
        %v847 = vpop.f32.mrf.mxu0
        %v848 = vadd.f32 0.0, %v847
        %v849 = vpop.f32.mrf.mxu0
        %v850 = vpop.f32.mrf.mxu0
        %v851 = vadd.f32 0.0, %v850
        %v852 = vpop.f32.mrf.mxu0
        %853 = vdwg.mxu0
        %v854 = vadd.f32 %v735, %v824
        %v855 = vadd.f32 %v736, %v827
        %v856 = vadd.f32 %v737, %v832
        %v857 = vadd.f32 %v738, %v835
        %v858 = vadd.f32 %v739, %v840
        %v859 = vadd.f32 %v740, %v843
        %v860 = vadd.f32 %v741, %v848
        %v861 = vadd.f32 %v742, %v851
        %s862 = scalar_lea.vmem %s274, 216
        %v863 = vld [vmem:[%s862] sm:$0xf]
        %v864 = vld [vmem:[%s862 + $0x8] sm:$0xf]
        %v865 = vld [vmem:[%s862 + $0x10] sm:$0xf]
        %v866 = vld [vmem:[%s862 + $0x18] sm:$0xf]
        %v867 = vld [vmem:[%s862 + $0x20] sm:$0xf]
        %v868 = vld [vmem:[%s862 + $0x28] sm:$0xf]
        %v869 = vld [vmem:[%s862 + $0x30] sm:$0xf]
        %v870 = vld [vmem:[%s862 + $0x38] sm:$0xf]
        %s871 = scalar_lea.vmem %s1, 8
        %v872 = vld [vmem:[%s871] sm:$0x3]
        %v881 = vunpack.c.l.b16 %v863
        %v882 = vunpack.c.l.b16 %v864
        %v883 = vunpack.c.l.b16 %v865
        %v884 = vunpack.c.l.b16 %v866
        %v885 = vunpack.c.l.b16 %v867
        %v886 = vunpack.c.l.b16 %v868
        %v887 = vunpack.c.l.b16 %v869
        %v888 = vunpack.c.l.b16 %v870
        %v889 = vpack.c.b16 %v882, %v881
        %v890 = vpack.c.b16 %v884, %v883
        %v891 = vpack.c.b16 %v886, %v885
        %v892 = vpack.c.b16 %v888, %v887
        %v894 = vsel %vm328, %v889, 0
        %v897 = vsel %vm328, %v890, 0
        %v900 = vsel %vm328, %v891, 0
        %v903 = vsel %vm328, %v892, 0
        %v906 = vsel %vm341, %v872, 0
        %908 = vmatprep.subr.bf16.mxu0 0
        %909 = vmatpush1.bf16.msra.mxu0 0
        %910 = vmatprep.subr.bf16.mxu0 0
        %911 = vmatpush1.bf16.msra.mxu0 0
        %912 = vmatprep.subr.bf16.mxu0 0
        %913 = vmatpush1.bf16.msra.mxu0 0
        %914 = vmatprep.subr.bf16.mxu0 0
        %915 = vmatpush1.bf16.msra.mxu0 0
        %916 = vmatprep.subr.bf16.mxu0 0
        %917 = vmatpush1.bf16.msra.mxu0 0
        %918 = vmatprep.subr.bf16.mxu0 0
        %919 = vmatpush1.bf16.msra.mxu0 0
        %920 = vmatprep.subr.bf16.mxu0 0
        %921 = vmatpush1.bf16.msra.mxu0 0
        %922 = vmatprep.subr.bf16.mxu0 0
        %923 = vmatpush1.bf16.msra.mxu0 %v906
        %924 = vmatprep.subr.bf16.mxu0 0
        %925 = vmatpush2.bf16.msra.mxu0 0
        %926 = vmatprep.subr.bf16.mxu0 0
        %927 = vmatpush2.bf16.msra.mxu0 0
        %928 = vmatprep.subr.bf16.mxu0 0
        %929 = vmatpush2.bf16.msra.mxu0 0
        %930 = vmatprep.subr.bf16.mxu0 0
        %931 = vmatpush2.bf16.msra.mxu0 0
        %932 = vmatprep.subr.bf16.mxu0 0
        %933 = vmatpush2.bf16.msra.mxu0 0
        %934 = vmatprep.subr.bf16.mxu0 0
        %935 = vmatpush2.bf16.msra.mxu0 0
        %936 = vmatprep.subr.bf16.mxu0 0
        %937 = vmatpush2.bf16.msra.mxu0 0
        %938 = vmatprep.subr.bf16.mxu0 0
        %939 = vmatpush2.bf16.msra.mxu0 0
        %940 = vmatprep.mubr.bf16.mxu0 0
        %941 = vmatmul.mubr.bf16.gmra.mxu0 %v894
        %v942 = vpop.f32.mrf.mxu0
        %v943 = vadd.f32 0.0, %v942
        %v944 = vpop.f32.mrf.mxu0
        %v945 = vpop.f32.mrf.mxu0
        %v946 = vadd.f32 0.0, %v945
        %v947 = vpop.f32.mrf.mxu0
        %948 = vmatprep.mubr.bf16.mxu0 0
        %949 = vmatmul.mubr.bf16.gmra.mxu0 %v897
        %v950 = vpop.f32.mrf.mxu0
        %v951 = vadd.f32 0.0, %v950
        %v952 = vpop.f32.mrf.mxu0
        %v953 = vpop.f32.mrf.mxu0
        %v954 = vadd.f32 0.0, %v953
        %v955 = vpop.f32.mrf.mxu0
        %956 = vmatprep.mubr.bf16.mxu0 0
        %957 = vmatmul.mubr.bf16.gmra.mxu0 %v900
        %v958 = vpop.f32.mrf.mxu0
        %v959 = vadd.f32 0.0, %v958
        %v960 = vpop.f32.mrf.mxu0
        %v961 = vpop.f32.mrf.mxu0
        %v962 = vadd.f32 0.0, %v961
        %v963 = vpop.f32.mrf.mxu0
        %964 = vmatprep.mubr.bf16.mxu0 0
        %965 = vmatmul.mubr.bf16.gmra.mxu0 %v903
        %v966 = vpop.f32.mrf.mxu0
        %v967 = vadd.f32 0.0, %v966
        %v968 = vpop.f32.mrf.mxu0
        %v969 = vpop.f32.mrf.mxu0
        %v970 = vadd.f32 0.0, %v969
        %v971 = vpop.f32.mrf.mxu0
        %972 = vdwg.mxu0
        %v973 = vadd.f32 %v854, %v943
        %v974 = vadd.f32 %v855, %v946
        %v975 = vadd.f32 %v856, %v951
        %v976 = vadd.f32 %v857, %v954
        %v977 = vadd.f32 %v858, %v959
        %v978 = vadd.f32 %v859, %v962
        %v979 = vadd.f32 %v860, %v967
        %v980 = vadd.f32 %v861, %v970
        %v981 = vld [vmem:[%s743] sm:$0xf]
        %v982 = vld [vmem:[%s743 + $0x4] sm:$0x1]
        %v983 = vld [vmem:[%s743 + $0x8] sm:$0xf]
        %v984 = vld [vmem:[%s743 + $0xc] sm:$0x1]
        %v985 = vld [vmem:[%s743 + $0x10] sm:$0xf]
        %v986 = vld [vmem:[%s743 + $0x14] sm:$0x1]
        %v987 = vld [vmem:[%s743 + $0x18] sm:$0xf]
        %v988 = vld [vmem:[%s743 + $0x1c] sm:$0x1]
        %v989 = vld [vmem:[%s743 + $0x20] sm:$0xf]
        %v990 = vld [vmem:[%s743 + $0x24] sm:$0x1]
        %v991 = vld [vmem:[%s743 + $0x28] sm:$0xf]
        %v992 = vld [vmem:[%s743 + $0x2c] sm:$0x1]
        %v993 = vld [vmem:[%s743 + $0x30] sm:$0xf]
        %v994 = vld [vmem:[%s743 + $0x34] sm:$0x1]
        %v995 = vld [vmem:[%s743 + $0x38] sm:$0xf]
        %v996 = vld [vmem:[%s743 + $0x3c] sm:$0x1]
        %v998 = vshrl.u32 %v981, 16
        %v1000 = vrot.slane %v998, 4
        %v1001 = vshll.u32 %v981, 16
        %v1003 = vrot.slane %v1001, 5
        %v1004 = vor.u32 %v1000, %v1003
        %v1005 = vrot.slane %v1004, 4
        %v1007 = vshll.u32 %v982, 16
        %v1009 = vrot.slane %v1007, 5
        %v1010 = vsel %vm528, %v1005, %v1009
        %v1012 = vshrl.u32 %v983, 16
        %v1014 = vrot.slane %v1012, 4
        %v1015 = vshll.u32 %v983, 16
        %v1017 = vrot.slane %v1015, 5
        %v1018 = vor.u32 %v1014, %v1017
        %v1019 = vrot.slane %v1018, 4
        %v1021 = vshll.u32 %v984, 16
        %v1023 = vrot.slane %v1021, 5
        %v1024 = vsel %vm528, %v1019, %v1023
        %v1026 = vshrl.u32 %v985, 16
        %v1028 = vrot.slane %v1026, 4
        %v1029 = vshll.u32 %v985, 16
        %v1031 = vrot.slane %v1029, 5
        %v1032 = vor.u32 %v1028, %v1031
        %v1033 = vrot.slane %v1032, 4
        %v1035 = vshll.u32 %v986, 16
        %v1037 = vrot.slane %v1035, 5
        %v1038 = vsel %vm528, %v1033, %v1037
        %v1040 = vshrl.u32 %v987, 16
        %v1042 = vrot.slane %v1040, 4
        %v1043 = vshll.u32 %v987, 16
        %v1045 = vrot.slane %v1043, 5
        %v1046 = vor.u32 %v1042, %v1045
        %v1047 = vrot.slane %v1046, 4
        %v1049 = vshll.u32 %v988, 16
        %v1051 = vrot.slane %v1049, 5
        %v1052 = vsel %vm528, %v1047, %v1051
        %v1054 = vshrl.u32 %v989, 16
        %v1056 = vrot.slane %v1054, 4
        %v1057 = vshll.u32 %v989, 16
        %v1059 = vrot.slane %v1057, 5
        %v1060 = vor.u32 %v1056, %v1059
        %v1061 = vrot.slane %v1060, 4
        %v1063 = vshll.u32 %v990, 16
        %v1065 = vrot.slane %v1063, 5
        %v1066 = vsel %vm528, %v1061, %v1065
        %v1068 = vshrl.u32 %v991, 16
        %v1070 = vrot.slane %v1068, 4
        %v1071 = vshll.u32 %v991, 16
        %v1073 = vrot.slane %v1071, 5
        %v1074 = vor.u32 %v1070, %v1073
        %v1075 = vrot.slane %v1074, 4
        %v1077 = vshll.u32 %v992, 16
        %v1079 = vrot.slane %v1077, 5
        %v1080 = vsel %vm528, %v1075, %v1079
        %v1082 = vshrl.u32 %v993, 16
        %v1084 = vrot.slane %v1082, 4
        %v1085 = vshll.u32 %v993, 16
        %v1087 = vrot.slane %v1085, 5
        %v1088 = vor.u32 %v1084, %v1087
        %v1089 = vrot.slane %v1088, 4
        %v1091 = vshll.u32 %v994, 16
        %v1093 = vrot.slane %v1091, 5
        %v1094 = vsel %vm528, %v1089, %v1093
        %v1096 = vshrl.u32 %v995, 16
        %v1098 = vrot.slane %v1096, 4
        %v1099 = vshll.u32 %v995, 16
        %v1101 = vrot.slane %v1099, 5
        %v1102 = vor.u32 %v1098, %v1101
        %v1103 = vrot.slane %v1102, 4
        %v1105 = vshll.u32 %v996, 16
        %v1107 = vrot.slane %v1105, 5
        %v1108 = vsel %vm528, %v1103, %v1107
        %s1109 = scalar_lea.vmem %s1, 10
        %v1110 = vld [vmem:[%s1109] sm:$0x3]
        %v1111 = vunpack.c.l.b16 %v1010
        %v1112 = vunpack.c.l.b16 %v1024
        %v1113 = vunpack.c.l.b16 %v1038
        %v1114 = vunpack.c.l.b16 %v1052
        %v1115 = vunpack.c.l.b16 %v1066
        %v1116 = vunpack.c.l.b16 %v1080
        %v1117 = vunpack.c.l.b16 %v1094
        %v1118 = vunpack.c.l.b16 %v1108
        %v1119 = vpack.c.b16 %v1112, %v1111
        %v1120 = vpack.c.b16 %v1114, %v1113
        %v1121 = vpack.c.b16 %v1116, %v1115
        %v1122 = vpack.c.b16 %v1118, %v1117
        %v1124 = vsel %vm328, %v1119, 0
        %v1127 = vsel %vm328, %v1120, 0
        %v1130 = vsel %vm328, %v1121, 0
        %v1133 = vsel %vm328, %v1122, 0
        %v1136 = vsel %vm341, %v1110, 0
        %1138 = vmatprep.subr.bf16.mxu0 0
        %1139 = vmatpush1.bf16.msra.mxu0 0
        %1140 = vmatprep.subr.bf16.mxu0 0
        %1141 = vmatpush1.bf16.msra.mxu0 0
        %1142 = vmatprep.subr.bf16.mxu0 0
        %1143 = vmatpush1.bf16.msra.mxu0 0
        %1144 = vmatprep.subr.bf16.mxu0 0
        %1145 = vmatpush1.bf16.msra.mxu0 0
        %1146 = vmatprep.subr.bf16.mxu0 0
        %1147 = vmatpush1.bf16.msra.mxu0 0
        %1148 = vmatprep.subr.bf16.mxu0 0
        %1149 = vmatpush1.bf16.msra.mxu0 0
        %1150 = vmatprep.subr.bf16.mxu0 0
        %1151 = vmatpush1.bf16.msra.mxu0 0
        %1152 = vmatprep.subr.bf16.mxu0 0
        %1153 = vmatpush1.bf16.msra.mxu0 %v1136
        %1154 = vmatprep.subr.bf16.mxu0 0
        %1155 = vmatpush2.bf16.msra.mxu0 0
        %1156 = vmatprep.subr.bf16.mxu0 0
        %1157 = vmatpush2.bf16.msra.mxu0 0
        %1158 = vmatprep.subr.bf16.mxu0 0
        %1159 = vmatpush2.bf16.msra.mxu0 0
        %1160 = vmatprep.subr.bf16.mxu0 0
        %1161 = vmatpush2.bf16.msra.mxu0 0
        %1162 = vmatprep.subr.bf16.mxu0 0
        %1163 = vmatpush2.bf16.msra.mxu0 0
        %1164 = vmatprep.subr.bf16.mxu0 0
        %1165 = vmatpush2.bf16.msra.mxu0 0
        %1166 = vmatprep.subr.bf16.mxu0 0
        %1167 = vmatpush2.bf16.msra.mxu0 0
        %1168 = vmatprep.subr.bf16.mxu0 0
        %1169 = vmatpush2.bf16.msra.mxu0 0
        %1170 = vmatprep.mubr.bf16.mxu0 0
        %1171 = vmatmul.mubr.bf16.gmra.mxu0 %v1124
        %v1172 = vpop.f32.mrf.mxu0
        %v1173 = vadd.f32 0.0, %v1172
        %v1174 = vpop.f32.mrf.mxu0
        %v1175 = vpop.f32.mrf.mxu0
        %v1176 = vadd.f32 0.0, %v1175
        %v1177 = vpop.f32.mrf.mxu0
        %1178 = vmatprep.mubr.bf16.mxu0 0
        %1179 = vmatmul.mubr.bf16.gmra.mxu0 %v1127
        %v1180 = vpop.f32.mrf.mxu0
        %v1181 = vadd.f32 0.0, %v1180
        %v1182 = vpop.f32.mrf.mxu0
        %v1183 = vpop.f32.mrf.mxu0
        %v1184 = vadd.f32 0.0, %v1183
        %v1185 = vpop.f32.mrf.mxu0
        %1186 = vmatprep.mubr.bf16.mxu0 0
        %1187 = vmatmul.mubr.bf16.gmra.mxu0 %v1130
        %v1188 = vpop.f32.mrf.mxu0
        %v1189 = vadd.f32 0.0, %v1188
        %v1190 = vpop.f32.mrf.mxu0
        %v1191 = vpop.f32.mrf.mxu0
        %v1192 = vadd.f32 0.0, %v1191
        %v1193 = vpop.f32.mrf.mxu0
        %1194 = vmatprep.mubr.bf16.mxu0 0
        %1195 = vmatmul.mubr.bf16.gmra.mxu0 %v1133
        %v1196 = vpop.f32.mrf.mxu0
        %v1197 = vadd.f32 0.0, %v1196
        %v1198 = vpop.f32.mrf.mxu0
        %v1199 = vpop.f32.mrf.mxu0
        %v1200 = vadd.f32 0.0, %v1199
        %v1201 = vpop.f32.mrf.mxu0
        %1202 = vdwg.mxu0
        %v1203 = vadd.f32 %v973, %v1173
        %v1204 = vadd.f32 %v974, %v1176
        %v1205 = vadd.f32 %v975, %v1181
        %v1206 = vadd.f32 %v976, %v1184
        %v1207 = vadd.f32 %v977, %v1189
        %v1208 = vadd.f32 %v978, %v1192
        %v1209 = vadd.f32 %v979, %v1197
        %v1210 = vadd.f32 %v980, %v1200
        %s1211 = scalar_lea.vmem %s274, 8
        %v1212 = vld [vmem:[%s1211] sm:$0xf]
        %v1213 = vld [vmem:[%s1211 + $0x8] sm:$0xf]
        %v1214 = vld [vmem:[%s1211 + $0x10] sm:$0xf]
        %v1215 = vld [vmem:[%s1211 + $0x18] sm:$0xf]
        %v1216 = vld [vmem:[%s1211 + $0x20] sm:$0xf]
        %v1217 = vld [vmem:[%s1211 + $0x28] sm:$0xf]
        %v1218 = vld [vmem:[%s1211 + $0x30] sm:$0xf]
        %v1219 = vld [vmem:[%s1211 + $0x38] sm:$0xf]
        %s1220 = scalar_lea.vmem %s1, 12
        %v1221 = vld [vmem:[%s1220] sm:$0x3]
        %v1230 = vunpack.c.l.b16 %v1212
        %v1231 = vunpack.c.l.b16 %v1213
        %v1232 = vunpack.c.l.b16 %v1214
        %v1233 = vunpack.c.l.b16 %v1215
        %v1234 = vunpack.c.l.b16 %v1216
        %v1235 = vunpack.c.l.b16 %v1217
        %v1236 = vunpack.c.l.b16 %v1218
        %v1237 = vunpack.c.l.b16 %v1219
        %v1238 = vpack.c.b16 %v1231, %v1230
        %v1239 = vpack.c.b16 %v1233, %v1232
        %v1240 = vpack.c.b16 %v1235, %v1234
        %v1241 = vpack.c.b16 %v1237, %v1236
        %v1243 = vsel %vm328, %v1238, 0
        %v1246 = vsel %vm328, %v1239, 0
        %v1249 = vsel %vm328, %v1240, 0
        %v1252 = vsel %vm328, %v1241, 0
        %v1255 = vsel %vm341, %v1221, 0
        %1257 = vmatprep.subr.bf16.mxu0 0
        %1258 = vmatpush1.bf16.msra.mxu0 0
        %1259 = vmatprep.subr.bf16.mxu0 0
        %1260 = vmatpush1.bf16.msra.mxu0 0
        %1261 = vmatprep.subr.bf16.mxu0 0
        %1262 = vmatpush1.bf16.msra.mxu0 0
        %1263 = vmatprep.subr.bf16.mxu0 0
        %1264 = vmatpush1.bf16.msra.mxu0 0
        %1265 = vmatprep.subr.bf16.mxu0 0
        %1266 = vmatpush1.bf16.msra.mxu0 0
        %1267 = vmatprep.subr.bf16.mxu0 0
        %1268 = vmatpush1.bf16.msra.mxu0 0
        %1269 = vmatprep.subr.bf16.mxu0 0
        %1270 = vmatpush1.bf16.msra.mxu0 0
        %1271 = vmatprep.subr.bf16.mxu0 0
        %1272 = vmatpush1.bf16.msra.mxu0 %v1255
        %1273 = vmatprep.subr.bf16.mxu0 0
        %1274 = vmatpush2.bf16.msra.mxu0 0
        %1275 = vmatprep.subr.bf16.mxu0 0
        %1276 = vmatpush2.bf16.msra.mxu0 0
        %1277 = vmatprep.subr.bf16.mxu0 0
        %1278 = vmatpush2.bf16.msra.mxu0 0
        %1279 = vmatprep.subr.bf16.mxu0 0
        %1280 = vmatpush2.bf16.msra.mxu0 0
        %1281 = vmatprep.subr.bf16.mxu0 0
        %1282 = vmatpush2.bf16.msra.mxu0 0
        %1283 = vmatprep.subr.bf16.mxu0 0
        %1284 = vmatpush2.bf16.msra.mxu0 0
        %1285 = vmatprep.subr.bf16.mxu0 0
        %1286 = vmatpush2.bf16.msra.mxu0 0
        %1287 = vmatprep.subr.bf16.mxu0 0
        %1288 = vmatpush2.bf16.msra.mxu0 0
        %1289 = vmatprep.mubr.bf16.mxu0 0
        %1290 = vmatmul.mubr.bf16.gmra.mxu0 %v1243
        %v1291 = vpop.f32.mrf.mxu0
        %v1292 = vadd.f32 0.0, %v1291
        %v1293 = vpop.f32.mrf.mxu0
        %v1294 = vpop.f32.mrf.mxu0
        %v1295 = vadd.f32 0.0, %v1294
        %v1296 = vpop.f32.mrf.mxu0
        %1297 = vmatprep.mubr.bf16.mxu0 0
        %1298 = vmatmul.mubr.bf16.gmra.mxu0 %v1246
        %v1299 = vpop.f32.mrf.mxu0
        %v1300 = vadd.f32 0.0, %v1299
        %v1301 = vpop.f32.mrf.mxu0
        %v1302 = vpop.f32.mrf.mxu0
        %v1303 = vadd.f32 0.0, %v1302
        %v1304 = vpop.f32.mrf.mxu0
        %1305 = vmatprep.mubr.bf16.mxu0 0
        %1306 = vmatmul.mubr.bf16.gmra.mxu0 %v1249
        %v1307 = vpop.f32.mrf.mxu0
        %v1308 = vadd.f32 0.0, %v1307
        %v1309 = vpop.f32.mrf.mxu0
        %v1310 = vpop.f32.mrf.mxu0
        %v1311 = vadd.f32 0.0, %v1310
        %v1312 = vpop.f32.mrf.mxu0
        %1313 = vmatprep.mubr.bf16.mxu0 0
        %1314 = vmatmul.mubr.bf16.gmra.mxu0 %v1252
        %v1315 = vpop.f32.mrf.mxu0
        %v1316 = vadd.f32 0.0, %v1315
        %v1317 = vpop.f32.mrf.mxu0
        %v1318 = vpop.f32.mrf.mxu0
        %v1319 = vadd.f32 0.0, %v1318
        %v1320 = vpop.f32.mrf.mxu0
        %1321 = vdwg.mxu0
        %v1322 = vadd.f32 %v1203, %v1292
        %v1323 = vadd.f32 %v1204, %v1295
        %v1324 = vadd.f32 %v1205, %v1300
        %v1325 = vadd.f32 %v1206, %v1303
        %v1326 = vadd.f32 %v1207, %v1308
        %v1327 = vadd.f32 %v1208, %v1311
        %v1328 = vadd.f32 %v1209, %v1316
        %v1329 = vadd.f32 %v1210, %v1319
        %s1330 = scalar_lea.vmem %s274, 80
        %v1331 = vld [vmem:[%s1330] sm:$0xf]
        %v1332 = vld [vmem:[%s1330 + $0x8] sm:$0xf]
        %v1333 = vld [vmem:[%s1330 + $0x10] sm:$0xf]
        %v1334 = vld [vmem:[%s1330 + $0x18] sm:$0xf]
        %v1335 = vld [vmem:[%s1330 + $0x20] sm:$0xf]
        %v1336 = vld [vmem:[%s1330 + $0x28] sm:$0xf]
        %v1337 = vld [vmem:[%s1330 + $0x30] sm:$0xf]
        %v1338 = vld [vmem:[%s1330 + $0x38] sm:$0xf]
        %s1339 = scalar_lea.vmem %s1, 14
        %v1340 = vld [vmem:[%s1339] sm:$0x3]
        %v1349 = vunpack.c.l.b16 %v1331
        %v1350 = vunpack.c.l.b16 %v1332
        %v1351 = vunpack.c.l.b16 %v1333
        %v1352 = vunpack.c.l.b16 %v1334
        %v1353 = vunpack.c.l.b16 %v1335
        %v1354 = vunpack.c.l.b16 %v1336
        %v1355 = vunpack.c.l.b16 %v1337
        %v1356 = vunpack.c.l.b16 %v1338
        %v1357 = vpack.c.b16 %v1350, %v1349
        %v1358 = vpack.c.b16 %v1352, %v1351
        %v1359 = vpack.c.b16 %v1354, %v1353
        %v1360 = vpack.c.b16 %v1356, %v1355
        %v1362 = vsel %vm328, %v1357, 0
        %v1365 = vsel %vm328, %v1358, 0
        %v1368 = vsel %vm328, %v1359, 0
        %v1371 = vsel %vm328, %v1360, 0
        %v1374 = vsel %vm341, %v1340, 0
        %1376 = vmatprep.subr.bf16.mxu0 0
        %1377 = vmatpush1.bf16.msra.mxu0 0
        %1378 = vmatprep.subr.bf16.mxu0 0
        %1379 = vmatpush1.bf16.msra.mxu0 0
        %1380 = vmatprep.subr.bf16.mxu0 0
        %1381 = vmatpush1.bf16.msra.mxu0 0
        %1382 = vmatprep.subr.bf16.mxu0 0
        %1383 = vmatpush1.bf16.msra.mxu0 0
        %1384 = vmatprep.subr.bf16.mxu0 0
        %1385 = vmatpush1.bf16.msra.mxu0 0
        %1386 = vmatprep.subr.bf16.mxu0 0
        %1387 = vmatpush1.bf16.msra.mxu0 0
        %1388 = vmatprep.subr.bf16.mxu0 0
        %1389 = vmatpush1.bf16.msra.mxu0 0
        %1390 = vmatprep.subr.bf16.mxu0 0
        %1391 = vmatpush1.bf16.msra.mxu0 %v1374
        %1392 = vmatprep.subr.bf16.mxu0 0
        %1393 = vmatpush2.bf16.msra.mxu0 0
        %1394 = vmatprep.subr.bf16.mxu0 0
        %1395 = vmatpush2.bf16.msra.mxu0 0
        %1396 = vmatprep.subr.bf16.mxu0 0
        %1397 = vmatpush2.bf16.msra.mxu0 0
        %1398 = vmatprep.subr.bf16.mxu0 0
        %1399 = vmatpush2.bf16.msra.mxu0 0
        %1400 = vmatprep.subr.bf16.mxu0 0
        %1401 = vmatpush2.bf16.msra.mxu0 0
        %1402 = vmatprep.subr.bf16.mxu0 0
        %1403 = vmatpush2.bf16.msra.mxu0 0
        %1404 = vmatprep.subr.bf16.mxu0 0
        %1405 = vmatpush2.bf16.msra.mxu0 0
        %1406 = vmatprep.subr.bf16.mxu0 0
        %1407 = vmatpush2.bf16.msra.mxu0 0
        %1408 = vmatprep.mubr.bf16.mxu0 0
        %1409 = vmatmul.mubr.bf16.gmra.mxu0 %v1362
        %v1410 = vpop.f32.mrf.mxu0
        %v1411 = vadd.f32 0.0, %v1410
        %v1412 = vpop.f32.mrf.mxu0
        %v1413 = vpop.f32.mrf.mxu0
        %v1414 = vadd.f32 0.0, %v1413
        %v1415 = vpop.f32.mrf.mxu0
        %1416 = vmatprep.mubr.bf16.mxu0 0
        %1417 = vmatmul.mubr.bf16.gmra.mxu0 %v1365
        %v1418 = vpop.f32.mrf.mxu0
        %v1419 = vadd.f32 0.0, %v1418
        %v1420 = vpop.f32.mrf.mxu0
        %v1421 = vpop.f32.mrf.mxu0
        %v1422 = vadd.f32 0.0, %v1421
        %v1423 = vpop.f32.mrf.mxu0
        %1424 = vmatprep.mubr.bf16.mxu0 0
        %1425 = vmatmul.mubr.bf16.gmra.mxu0 %v1368
        %v1426 = vpop.f32.mrf.mxu0
        %v1427 = vadd.f32 0.0, %v1426
        %v1428 = vpop.f32.mrf.mxu0
        %v1429 = vpop.f32.mrf.mxu0
        %v1430 = vadd.f32 0.0, %v1429
        %v1431 = vpop.f32.mrf.mxu0
        %1432 = vmatprep.mubr.bf16.mxu0 0
        %1433 = vmatmul.mubr.bf16.gmra.mxu0 %v1371
        %v1434 = vpop.f32.mrf.mxu0
        %v1435 = vadd.f32 0.0, %v1434
        %v1436 = vpop.f32.mrf.mxu0
        %v1437 = vpop.f32.mrf.mxu0
        %v1438 = vadd.f32 0.0, %v1437
        %v1439 = vpop.f32.mrf.mxu0
        %1440 = vdwg.mxu0
        %v1441 = vadd.f32 %v1322, %v1411
        %v1442 = vadd.f32 %v1323, %v1414
        %v1443 = vadd.f32 %v1324, %v1419
        %v1444 = vadd.f32 %v1325, %v1422
        %v1445 = vadd.f32 %v1326, %v1427
        %v1446 = vadd.f32 %v1327, %v1430
        %v1447 = vadd.f32 %v1328, %v1435
        %v1448 = vadd.f32 %v1329, %v1438
        %v1449 = vld [vmem:[%s1211] sm:$0xf]
        %v1450 = vld [vmem:[%s1211 + $0x4] sm:$0x1]
        %v1451 = vld [vmem:[%s1211 + $0x8] sm:$0xf]
        %v1452 = vld [vmem:[%s1211 + $0xc] sm:$0x1]
        %v1453 = vld [vmem:[%s1211 + $0x10] sm:$0xf]
        %v1454 = vld [vmem:[%s1211 + $0x14] sm:$0x1]
        %v1455 = vld [vmem:[%s1211 + $0x18] sm:$0xf]
        %v1456 = vld [vmem:[%s1211 + $0x1c] sm:$0x1]
        %v1457 = vld [vmem:[%s1211 + $0x20] sm:$0xf]
        %v1458 = vld [vmem:[%s1211 + $0x24] sm:$0x1]
        %v1459 = vld [vmem:[%s1211 + $0x28] sm:$0xf]
        %v1460 = vld [vmem:[%s1211 + $0x2c] sm:$0x1]
        %v1461 = vld [vmem:[%s1211 + $0x30] sm:$0xf]
        %v1462 = vld [vmem:[%s1211 + $0x34] sm:$0x1]
        %v1463 = vld [vmem:[%s1211 + $0x38] sm:$0xf]
        %v1464 = vld [vmem:[%s1211 + $0x3c] sm:$0x1]
        %v1466 = vshrl.u32 %v1449, 16
        %v1468 = vrot.slane %v1466, 4
        %v1469 = vshll.u32 %v1449, 16
        %v1471 = vrot.slane %v1469, 5
        %v1472 = vor.u32 %v1468, %v1471
        %v1473 = vrot.slane %v1472, 4
        %v1475 = vshll.u32 %v1450, 16
        %v1477 = vrot.slane %v1475, 5
        %v1478 = vsel %vm528, %v1473, %v1477
        %v1480 = vshrl.u32 %v1451, 16
        %v1482 = vrot.slane %v1480, 4
        %v1483 = vshll.u32 %v1451, 16
        %v1485 = vrot.slane %v1483, 5
        %v1486 = vor.u32 %v1482, %v1485
        %v1487 = vrot.slane %v1486, 4
        %v1489 = vshll.u32 %v1452, 16
        %v1491 = vrot.slane %v1489, 5
        %v1492 = vsel %vm528, %v1487, %v1491
        %v1494 = vshrl.u32 %v1453, 16
        %v1496 = vrot.slane %v1494, 4
        %v1497 = vshll.u32 %v1453, 16
        %v1499 = vrot.slane %v1497, 5
        %v1500 = vor.u32 %v1496, %v1499
        %v1501 = vrot.slane %v1500, 4
        %v1503 = vshll.u32 %v1454, 16
        %v1505 = vrot.slane %v1503, 5
        %v1506 = vsel %vm528, %v1501, %v1505
        %v1508 = vshrl.u32 %v1455, 16
        %v1510 = vrot.slane %v1508, 4
        %v1511 = vshll.u32 %v1455, 16
        %v1513 = vrot.slane %v1511, 5
        %v1514 = vor.u32 %v1510, %v1513
        %v1515 = vrot.slane %v1514, 4
        %v1517 = vshll.u32 %v1456, 16
        %v1519 = vrot.slane %v1517, 5
        %v1520 = vsel %vm528, %v1515, %v1519
        %v1522 = vshrl.u32 %v1457, 16
        %v1524 = vrot.slane %v1522, 4
        %v1525 = vshll.u32 %v1457, 16
        %v1527 = vrot.slane %v1525, 5
        %v1528 = vor.u32 %v1524, %v1527
        %v1529 = vrot.slane %v1528, 4
        %v1531 = vshll.u32 %v1458, 16
        %v1533 = vrot.slane %v1531, 5
        %v1534 = vsel %vm528, %v1529, %v1533
        %v1536 = vshrl.u32 %v1459, 16
        %v1538 = vrot.slane %v1536, 4
        %v1539 = vshll.u32 %v1459, 16
        %v1541 = vrot.slane %v1539, 5
        %v1542 = vor.u32 %v1538, %v1541
        %v1543 = vrot.slane %v1542, 4
        %v1545 = vshll.u32 %v1460, 16
        %v1547 = vrot.slane %v1545, 5
        %v1548 = vsel %vm528, %v1543, %v1547
        %v1550 = vshrl.u32 %v1461, 16
        %v1552 = vrot.slane %v1550, 4
        %v1553 = vshll.u32 %v1461, 16
        %v1555 = vrot.slane %v1553, 5
        %v1556 = vor.u32 %v1552, %v1555
        %v1557 = vrot.slane %v1556, 4
        %v1559 = vshll.u32 %v1462, 16
        %v1561 = vrot.slane %v1559, 5
        %v1562 = vsel %vm528, %v1557, %v1561
        %v1564 = vshrl.u32 %v1463, 16
        %v1566 = vrot.slane %v1564, 4
        %v1567 = vshll.u32 %v1463, 16
        %v1569 = vrot.slane %v1567, 5
        %v1570 = vor.u32 %v1566, %v1569
        %v1571 = vrot.slane %v1570, 4
        %v1573 = vshll.u32 %v1464, 16
        %v1575 = vrot.slane %v1573, 5
        %v1576 = vsel %vm528, %v1571, %v1575
        %s1577 = scalar_lea.vmem %s1, 16
        %v1578 = vld [vmem:[%s1577] sm:$0x3]
        %v1579 = vunpack.c.l.b16 %v1478
        %v1580 = vunpack.c.l.b16 %v1492
        %v1581 = vunpack.c.l.b16 %v1506
        %v1582 = vunpack.c.l.b16 %v1520
        %v1583 = vunpack.c.l.b16 %v1534
        %v1584 = vunpack.c.l.b16 %v1548
        %v1585 = vunpack.c.l.b16 %v1562
        %v1586 = vunpack.c.l.b16 %v1576
        %v1587 = vpack.c.b16 %v1580, %v1579
        %v1588 = vpack.c.b16 %v1582, %v1581
        %v1589 = vpack.c.b16 %v1584, %v1583
        %v1590 = vpack.c.b16 %v1586, %v1585
        %v1592 = vsel %vm328, %v1587, 0
        %v1595 = vsel %vm328, %v1588, 0
        %v1598 = vsel %vm328, %v1589, 0
        %v1601 = vsel %vm328, %v1590, 0
        %v1604 = vsel %vm341, %v1578, 0
        %1606 = vmatprep.subr.bf16.mxu0 0
        %1607 = vmatpush1.bf16.msra.mxu0 0
        %1608 = vmatprep.subr.bf16.mxu0 0
        %1609 = vmatpush1.bf16.msra.mxu0 0
        %1610 = vmatprep.subr.bf16.mxu0 0
        %1611 = vmatpush1.bf16.msra.mxu0 0
        %1612 = vmatprep.subr.bf16.mxu0 0
        %1613 = vmatpush1.bf16.msra.mxu0 0
        %1614 = vmatprep.subr.bf16.mxu0 0
        %1615 = vmatpush1.bf16.msra.mxu0 0
        %1616 = vmatprep.subr.bf16.mxu0 0
        %1617 = vmatpush1.bf16.msra.mxu0 0
        %1618 = vmatprep.subr.bf16.mxu0 0
        %1619 = vmatpush1.bf16.msra.mxu0 0
        %1620 = vmatprep.subr.bf16.mxu0 0
        %1621 = vmatpush1.bf16.msra.mxu0 %v1604
        %1622 = vmatprep.subr.bf16.mxu0 0
        %1623 = vmatpush2.bf16.msra.mxu0 0
        %1624 = vmatprep.subr.bf16.mxu0 0
        %1625 = vmatpush2.bf16.msra.mxu0 0
        %1626 = vmatprep.subr.bf16.mxu0 0
        %1627 = vmatpush2.bf16.msra.mxu0 0
        %1628 = vmatprep.subr.bf16.mxu0 0
        %1629 = vmatpush2.bf16.msra.mxu0 0
        %1630 = vmatprep.subr.bf16.mxu0 0
        %1631 = vmatpush2.bf16.msra.mxu0 0
        %1632 = vmatprep.subr.bf16.mxu0 0
        %1633 = vmatpush2.bf16.msra.mxu0 0
        %1634 = vmatprep.subr.bf16.mxu0 0
        %1635 = vmatpush2.bf16.msra.mxu0 0
        %1636 = vmatprep.subr.bf16.mxu0 0
        %1637 = vmatpush2.bf16.msra.mxu0 0
        %1638 = vmatprep.mubr.bf16.mxu0 0
        %1639 = vmatmul.mubr.bf16.gmra.mxu0 %v1592
        %v1640 = vpop.f32.mrf.mxu0
        %v1641 = vadd.f32 0.0, %v1640
        %v1642 = vpop.f32.mrf.mxu0
        %v1643 = vpop.f32.mrf.mxu0
        %v1644 = vadd.f32 0.0, %v1643
        %v1645 = vpop.f32.mrf.mxu0
        %1646 = vmatprep.mubr.bf16.mxu0 0
        %1647 = vmatmul.mubr.bf16.gmra.mxu0 %v1595
        %v1648 = vpop.f32.mrf.mxu0
        %v1649 = vadd.f32 0.0, %v1648
        %v1650 = vpop.f32.mrf.mxu0
        %v1651 = vpop.f32.mrf.mxu0
        %v1652 = vadd.f32 0.0, %v1651
        %v1653 = vpop.f32.mrf.mxu0
        %1654 = vmatprep.mubr.bf16.mxu0 0
        %1655 = vmatmul.mubr.bf16.gmra.mxu0 %v1598
        %v1656 = vpop.f32.mrf.mxu0
        %v1657 = vadd.f32 0.0, %v1656
        %v1658 = vpop.f32.mrf.mxu0
        %v1659 = vpop.f32.mrf.mxu0
        %v1660 = vadd.f32 0.0, %v1659
        %v1661 = vpop.f32.mrf.mxu0
        %1662 = vmatprep.mubr.bf16.mxu0 0
        %1663 = vmatmul.mubr.bf16.gmra.mxu0 %v1601
        %v1664 = vpop.f32.mrf.mxu0
        %v1665 = vadd.f32 0.0, %v1664
        %v1666 = vpop.f32.mrf.mxu0
        %v1667 = vpop.f32.mrf.mxu0
        %v1668 = vadd.f32 0.0, %v1667
        %v1669 = vpop.f32.mrf.mxu0
        %1670 = vdwg.mxu0
        %v1671 = vadd.f32 %v1441, %v1641
        %v1672 = vadd.f32 %v1442, %v1644
        %v1673 = vadd.f32 %v1443, %v1649
        %v1674 = vadd.f32 %v1444, %v1652
        %v1675 = vadd.f32 %v1445, %v1657
        %v1676 = vadd.f32 %v1446, %v1660
        %v1677 = vadd.f32 %v1447, %v1665
        %v1678 = vadd.f32 %v1448, %v1668
        %v1679 = vpack.c.bf16 %v1672, %v1671
        %v1680 = vpack.c.bf16 %v1674, %v1673
        %v1681 = vpack.c.bf16 %v1676, %v1675
        %v1682 = vpack.c.bf16 %v1678, %v1677
        %v1687 = vunpack.c.l.b16 %v1679
        %v1688 = vunpack.c.h.b16 %v1679
        %v1689 = vunpack.c.l.b16 %v1680
        %v1690 = vunpack.c.h.b16 %v1680
        %v1691 = vunpack.c.l.b16 %v1681
        %v1692 = vunpack.c.h.b16 %v1681
        %v1693 = vunpack.c.l.b16 %v1682
        %v1694 = vunpack.c.h.b16 %v1682
        %v1695 = vpack.c.b16 %v1687, %v1687
        %v1696 = vpack.c.b16 %v1688, %v1688
        %v1697 = vpack.c.b16 %v1689, %v1689
        %v1698 = vpack.c.b16 %v1690, %v1690
        %v1699 = vpack.c.b16 %v1691, %v1691
        %v1700 = vpack.c.b16 %v1692, %v1692
        %v1701 = vpack.c.b16 %v1693, %v1693
        %v1702 = vpack.c.b16 %v1694, %v1694
        %vm1711 = vcmask 60416
        %1712 = vst.msk [vmem:[%s279] sm:$0xf] %vm1711, %v1695
        %1713 = vst.msk [vmem:[%s279 + $0x4] sm:$0xf] %vm1711, %v1696
        %1714 = vst.msk [vmem:[%s279 + $0x8] sm:$0xf] %vm1711, %v1697
        %1715 = vst.msk [vmem:[%s279 + $0xc] sm:$0xf] %vm1711, %v1698
        %1716 = vst.msk [vmem:[%s279 + $0x10] sm:$0xf] %vm1711, %v1699
        %1717 = vst.msk [vmem:[%s279 + $0x14] sm:$0xf] %vm1711, %v1700
        %1718 = vst.msk [vmem:[%s279 + $0x18] sm:$0xf] %vm1711, %v1701
        %1719 = vst.msk [vmem:[%s279 + $0x1c] sm:$0xf] %vm1711, %v1702
        %vm1720 = vcmask 64512
        %v1721 = vsel %vm1720, %v1671, 0.0
        %v1722 = vsel %vm1720, %v1672, 0.0
        %v1723 = vadd.f32 %v1721, %v1722
        %v1724 = vsel %vm1720, %v1673, 0.0
        %v1725 = vadd.f32 %v1723, %v1724
        %v1726 = vsel %vm1720, %v1674, 0.0
        %v1727 = vadd.f32 %v1725, %v1726
        %v1728 = vsel %vm1720, %v1675, 0.0
        %v1729 = vadd.f32 %v1727, %v1728
        %v1730 = vsel %vm1720, %v1676, 0.0
        %v1731 = vadd.f32 %v1729, %v1730
        %v1732 = vsel %vm1720, %v1677, 0.0
        %v1733 = vadd.f32 %v1731, %v1732
        %v1734 = vsel %vm1720, %v1678, 0.0
        %v1735 = vadd.f32 %v1733, %v1734
        %v1736 = vrot.slane %v1735, 4
        %v1737 = vadd.f32 %v1735, %v1736
        %v1738 = vrot.slane %v1737, 2
        %v1739 = vadd.f32 %v1737, %v1738
        %v1740 = vrot.slane %v1739, 1
        %v1741 = vadd.f32 %v1739, %v1740
        %vm1742 = vcmask 57344
        %1743 = vst.msk [vmem:[%s255] sm:$0x1] %vm1742, %v1741
        %v1744 = vmul.f32 %v1671, %v1671
        %v1745 = vmul.f32 %v1672, %v1672
        %v1746 = vmul.f32 %v1673, %v1673
        %v1747 = vmul.f32 %v1674, %v1674
        %v1748 = vmul.f32 %v1675, %v1675
        %v1749 = vmul.f32 %v1676, %v1676
        %v1750 = vmul.f32 %v1677, %v1677
        %v1751 = vmul.f32 %v1678, %v1678
        %v1752 = vsel %vm1720, %v1744, 0.0
        %v1753 = vsel %vm1720, %v1745, 0.0
        %v1754 = vadd.f32 %v1752, %v1753
        %v1755 = vsel %vm1720, %v1746, 0.0
        %v1756 = vadd.f32 %v1754, %v1755
        %v1757 = vsel %vm1720, %v1747, 0.0
        %v1758 = vadd.f32 %v1756, %v1757
        %v1759 = vsel %vm1720, %v1748, 0.0
        %v1760 = vadd.f32 %v1758, %v1759
        %v1761 = vsel %vm1720, %v1749, 0.0
        %v1762 = vadd.f32 %v1760, %v1761
        %v1763 = vsel %vm1720, %v1750, 0.0
        %v1764 = vadd.f32 %v1762, %v1763
        %v1765 = vsel %vm1720, %v1751, 0.0
        %v1766 = vadd.f32 %v1764, %v1765
        %v1767 = vrot.slane %v1766, 4
        %v1768 = vadd.f32 %v1766, %v1767
        %v1769 = vrot.slane %v1768, 2
        %v1770 = vadd.f32 %v1768, %v1769
        %v1771 = vrot.slane %v1770, 1
        %v1772 = vadd.f32 %v1770, %v1771
        %1773 = vst.msk [vmem:[%s255 + $0x1] sm:$0x1] %vm1742, %v1772
        %v1774 = vld [vmem:[%s862] sm:$0xf]
        %v1775 = vld [vmem:[%s862 + $0x8] sm:$0xf]
        %v1776 = vld [vmem:[%s862 + $0x10] sm:$0xf]
        %v1777 = vld [vmem:[%s862 + $0x18] sm:$0xf]
        %v1778 = vld [vmem:[%s862 + $0x20] sm:$0xf]
        %v1779 = vld [vmem:[%s862 + $0x28] sm:$0xf]
        %v1780 = vld [vmem:[%s862 + $0x30] sm:$0xf]
        %v1781 = vld [vmem:[%s862 + $0x38] sm:$0xf]
        %v1782 = vld [vmem:[%s2] sm:$0x3]
        %v1791 = vunpack.c.l.b16 %v1774
        %v1792 = vunpack.c.l.b16 %v1775
        %v1793 = vunpack.c.l.b16 %v1776
        %v1794 = vunpack.c.l.b16 %v1777
        %v1795 = vunpack.c.l.b16 %v1778
        %v1796 = vunpack.c.l.b16 %v1779
        %v1797 = vunpack.c.l.b16 %v1780
        %v1798 = vunpack.c.l.b16 %v1781
        %v1799 = vpack.c.b16 %v1792, %v1791
        %v1800 = vpack.c.b16 %v1794, %v1793
        %v1801 = vpack.c.b16 %v1796, %v1795
        %v1802 = vpack.c.b16 %v1798, %v1797
        %v1804 = vsel %vm328, %v1799, 0
        %v1807 = vsel %vm328, %v1800, 0
        %v1810 = vsel %vm328, %v1801, 0
        %v1813 = vsel %vm328, %v1802, 0
        %v1816 = vsel %vm341, %v1782, 0
        %1818 = vmatprep.subr.bf16.mxu0 0
        %1819 = vmatpush1.bf16.msra.mxu0 0
        %1820 = vmatprep.subr.bf16.mxu0 0
        %1821 = vmatpush1.bf16.msra.mxu0 0
        %1822 = vmatprep.subr.bf16.mxu0 0
        %1823 = vmatpush1.bf16.msra.mxu0 0
        %1824 = vmatprep.subr.bf16.mxu0 0
        %1825 = vmatpush1.bf16.msra.mxu0 0
        %1826 = vmatprep.subr.bf16.mxu0 0
        %1827 = vmatpush1.bf16.msra.mxu0 0
        %1828 = vmatprep.subr.bf16.mxu0 0
        %1829 = vmatpush1.bf16.msra.mxu0 0
        %1830 = vmatprep.subr.bf16.mxu0 0
        %1831 = vmatpush1.bf16.msra.mxu0 0
        %1832 = vmatprep.subr.bf16.mxu0 0
        %1833 = vmatpush1.bf16.msra.mxu0 %v1816
        %1834 = vmatprep.subr.bf16.mxu0 0
        %1835 = vmatpush2.bf16.msra.mxu0 0
        %1836 = vmatprep.subr.bf16.mxu0 0
        %1837 = vmatpush2.bf16.msra.mxu0 0
        %1838 = vmatprep.subr.bf16.mxu0 0
        %1839 = vmatpush2.bf16.msra.mxu0 0
        %1840 = vmatprep.subr.bf16.mxu0 0
        %1841 = vmatpush2.bf16.msra.mxu0 0
        %1842 = vmatprep.subr.bf16.mxu0 0
        %1843 = vmatpush2.bf16.msra.mxu0 0
        %1844 = vmatprep.subr.bf16.mxu0 0
        %1845 = vmatpush2.bf16.msra.mxu0 0
        %1846 = vmatprep.subr.bf16.mxu0 0
        %1847 = vmatpush2.bf16.msra.mxu0 0
        %1848 = vmatprep.subr.bf16.mxu0 0
        %1849 = vmatpush2.bf16.msra.mxu0 0
        %1850 = vmatprep.mubr.bf16.mxu0 0
        %1851 = vmatmul.mubr.bf16.gmra.mxu0 %v1804
        %v1852 = vpop.f32.mrf.mxu0
        %v1853 = vadd.f32 0.0, %v1852
        %v1854 = vpop.f32.mrf.mxu0
        %v1855 = vpop.f32.mrf.mxu0
        %v1856 = vadd.f32 0.0, %v1855
        %v1857 = vpop.f32.mrf.mxu0
        %1858 = vmatprep.mubr.bf16.mxu0 0
        %1859 = vmatmul.mubr.bf16.gmra.mxu0 %v1807
        %v1860 = vpop.f32.mrf.mxu0
        %v1861 = vadd.f32 0.0, %v1860
        %v1862 = vpop.f32.mrf.mxu0
        %v1863 = vpop.f32.mrf.mxu0
        %v1864 = vadd.f32 0.0, %v1863
        %v1865 = vpop.f32.mrf.mxu0
        %1866 = vmatprep.mubr.bf16.mxu0 0
        %1867 = vmatmul.mubr.bf16.gmra.mxu0 %v1810
        %v1868 = vpop.f32.mrf.mxu0
        %v1869 = vadd.f32 0.0, %v1868
        %v1870 = vpop.f32.mrf.mxu0
        %v1871 = vpop.f32.mrf.mxu0
        %v1872 = vadd.f32 0.0, %v1871
        %v1873 = vpop.f32.mrf.mxu0
        %1874 = vmatprep.mubr.bf16.mxu0 0
        %1875 = vmatmul.mubr.bf16.gmra.mxu0 %v1813
        %v1876 = vpop.f32.mrf.mxu0
        %v1877 = vadd.f32 0.0, %v1876
        %v1878 = vpop.f32.mrf.mxu0
        %v1879 = vpop.f32.mrf.mxu0
        %v1880 = vadd.f32 0.0, %v1879
        %v1881 = vpop.f32.mrf.mxu0
        %1882 = vdwg.mxu0
        %v1883 = vpack.c.bf16 %v1856, %v1853
        %v1884 = vpack.c.bf16 %v1864, %v1861
        %v1885 = vpack.c.bf16 %v1872, %v1869
        %v1886 = vpack.c.bf16 %v1880, %v1877
        %v1891 = vunpack.c.l.b16 %v1883
        %v1892 = vunpack.c.h.b16 %v1883
        %v1893 = vunpack.c.l.b16 %v1884
        %v1894 = vunpack.c.h.b16 %v1884
        %v1895 = vunpack.c.l.b16 %v1885
        %v1896 = vunpack.c.h.b16 %v1885
        %v1897 = vunpack.c.l.b16 %v1886
        %v1898 = vunpack.c.h.b16 %v1886
        %v1899 = vpack.c.b16 %v1891, %v1891
        %v1900 = vpack.c.b16 %v1892, %v1892
        %v1901 = vpack.c.b16 %v1893, %v1893
        %v1902 = vpack.c.b16 %v1894, %v1894
        %v1903 = vpack.c.b16 %v1895, %v1895
        %v1904 = vpack.c.b16 %v1896, %v1896
        %v1905 = vpack.c.b16 %v1897, %v1897
        %v1906 = vpack.c.b16 %v1898, %v1898
        %1915 = vst.msk [vmem:[%s285] sm:$0xf] %vm1711, %v1899
        %1916 = vst.msk [vmem:[%s285 + $0x4] sm:$0xf] %vm1711, %v1900
        %1917 = vst.msk [vmem:[%s285 + $0x8] sm:$0xf] %vm1711, %v1901
        %1918 = vst.msk [vmem:[%s285 + $0xc] sm:$0xf] %vm1711, %v1902
        %1919 = vst.msk [vmem:[%s285 + $0x10] sm:$0xf] %vm1711, %v1903
        %1920 = vst.msk [vmem:[%s285 + $0x14] sm:$0xf] %vm1711, %v1904
        %1921 = vst.msk [vmem:[%s285 + $0x18] sm:$0xf] %vm1711, %v1905
        %1922 = vst.msk [vmem:[%s285 + $0x1c] sm:$0xf] %vm1711, %v1906
        %v1923 = vsel %vm1720, %v1853, 0.0
        %v1924 = vsel %vm1720, %v1856, 0.0
        %v1925 = vadd.f32 %v1923, %v1924
        %v1926 = vsel %vm1720, %v1861, 0.0
        %v1927 = vadd.f32 %v1925, %v1926
        %v1928 = vsel %vm1720, %v1864, 0.0
        %v1929 = vadd.f32 %v1927, %v1928
        %v1930 = vsel %vm1720, %v1869, 0.0
        %v1931 = vadd.f32 %v1929, %v1930
        %v1932 = vsel %vm1720, %v1872, 0.0
        %v1933 = vadd.f32 %v1931, %v1932
        %v1934 = vsel %vm1720, %v1877, 0.0
        %v1935 = vadd.f32 %v1933, %v1934
        %v1936 = vsel %vm1720, %v1880, 0.0
        %v1937 = vadd.f32 %v1935, %v1936
        %v1938 = vrot.slane %v1937, 4
        %v1939 = vadd.f32 %v1937, %v1938
        %v1940 = vrot.slane %v1939, 2
        %v1941 = vadd.f32 %v1939, %v1940
        %v1942 = vrot.slane %v1941, 1
        %v1943 = vadd.f32 %v1941, %v1942
        %1944 = vst.msk [vmem:[%s269] sm:$0x1] %vm1742, %v1943
        %v1945 = vmul.f32 %v1853, %v1853
        %v1946 = vmul.f32 %v1856, %v1856
        %v1947 = vmul.f32 %v1861, %v1861
        %v1948 = vmul.f32 %v1864, %v1864
        %v1949 = vmul.f32 %v1869, %v1869
        %v1950 = vmul.f32 %v1872, %v1872
        %v1951 = vmul.f32 %v1877, %v1877
        %v1952 = vmul.f32 %v1880, %v1880
        %v1953 = vsel %vm1720, %v1945, 0.0
        %v1954 = vsel %vm1720, %v1946, 0.0
        %v1955 = vadd.f32 %v1953, %v1954
        %v1956 = vsel %vm1720, %v1947, 0.0
        %v1957 = vadd.f32 %v1955, %v1956
        %v1958 = vsel %vm1720, %v1948, 0.0
        %v1959 = vadd.f32 %v1957, %v1958
        %v1960 = vsel %vm1720, %v1949, 0.0
        %v1961 = vadd.f32 %v1959, %v1960
        %v1962 = vsel %vm1720, %v1950, 0.0
        %v1963 = vadd.f32 %v1961, %v1962
        %v1964 = vsel %vm1720, %v1951, 0.0
        %v1965 = vadd.f32 %v1963, %v1964
        %v1966 = vsel %vm1720, %v1952, 0.0
        %v1967 = vadd.f32 %v1965, %v1966
        %v1968 = vrot.slane %v1967, 4
        %v1969 = vadd.f32 %v1967, %v1968
        %v1970 = vrot.slane %v1969, 2
        %v1971 = vadd.f32 %v1969, %v1970
        %v1972 = vrot.slane %v1971, 1
        %v1973 = vadd.f32 %v1971, %v1972
        %1974 = vst.msk [vmem:[%s269 + $0x1] sm:$0x1] %vm1742, %v1973
        %s1975 = smul.u32 8, %s24
        %p1976 = scmp.lt.s32.totalorder %s1975, 15
        %s1977 = scalar_select %p1976, %s1975, 15
        %s1978 = smul.addr %s1977, 4
        %s1979 = scalar_lea.vmem %s3, %s1978
        %s1980 = sand.u32 %s126, 1
        %s1981 = scalar_lea.sflag [#allocation3], %s1980
        %s1982 = sand.u32 %s126, 1
        %s1983 = smul.addr %s1982, 2
        %s1984 = scalar_lea.vmem [#allocation2], %s1983
        %s1985 = smul.u32 8, %s24
        %p1986 = scmp.lt.s32.totalorder %s1985, 15
        %s1987 = scalar_select %p1986, %s1985, 15
        %s1988 = smul.addr %s1987, 4
        %s1989 = scalar_lea.vmem %s5, %s1988
        %s1990 = sand.u32 %s178, 1
        %s1991 = scalar_lea.sflag [#allocation5], %s1990
        %s1992 = sand.u32 %s178, 1
        %s1993 = smul.addr %s1992, 2
        %s1994 = scalar_lea.vmem [#allocation4], %s1993
        // Predicated region
        $region33: #{tpu_custom_call.1} parent=31 // pred_check
          %p1995 = pneg %p110
        $region34: #{tpu_custom_call.1} parent=31 // pred_check_branch
          %1997 = sbr.rel (%p1995) target = $region36
        $region35: #{tpu_custom_call.1} parent=31 // pred_region
          %s1998 = smul.u32 8, %s24
        $region36: #{tpu_custom_call.1} parent=31 // pred_fallthru
          _
        // Predicated region
        $region37: #{tpu_custom_call.1} parent=31 // pred_check
          %p1999 = pneg %p136
        $region38: #{tpu_custom_call.1} parent=31 // pred_check_branch
          %2001 = sbr.rel (%p1999) target = $region40
        $region39: #{tpu_custom_call.1} parent=31 // pred_region
          %s2003 = ssub.s32 32, 32
          %2004 = vsyncadd %s1981, %s2003
          %s2005 = smul.addr %s24, 32
          %s2006 = scalar_lea.hbm %s4, %s2005
          %s2008 = sshll.u32 %s1984, 4
          %s2009 = int_to_ptr.vmem [resolvable:$true] %s2008
          %2011 = dma.vmem_to_hbm [thread:$0]  %s2009, 32, %s2006, %s1981
        $region40: #{tpu_custom_call.1} parent=31 // pred_fallthru
          _
        // Predicated region
        $region41: #{tpu_custom_call.1} parent=31 // pred_check
          %p2012 = pneg %p162
        $region42: #{tpu_custom_call.1} parent=31 // pred_check_branch
          %2014 = sbr.rel (%p2012) target = $region44
        $region43: #{tpu_custom_call.1} parent=31 // pred_region
          %s2015 = smul.u32 8, %s24
        $region44: #{tpu_custom_call.1} parent=31 // pred_fallthru
          _
        // Predicated region
        $region45: #{tpu_custom_call.1} parent=31 // pred_check
          %p2016 = pneg %p188
        $region46: #{tpu_custom_call.1} parent=31 // pred_check_branch
          %2018 = sbr.rel (%p2016) target = $region48
        $region47: #{tpu_custom_call.1} parent=31 // pred_region
          %s2020 = ssub.s32 32, 32
          %2021 = vsyncadd %s1991, %s2020
          %s2022 = smul.addr %s24, 32
          %s2023 = scalar_lea.hbm %s6, %s2022
          %s2025 = sshll.u32 %s1994, 4
          %s2026 = int_to_ptr.vmem [resolvable:$true] %s2025
          %2028 = dma.vmem_to_hbm [thread:$0]  %s2026, 32, %s2023, %s1991
        $region48: #{tpu_custom_call.1} parent=31 // pred_fallthru
          _
      $region32: #{tpu_custom_call.1} parent=5 // pred_fallthru
        _
      %p2029 = scmp.le.s32.totalorder 2, %s19
      // Predicated region
      $region49: #{tpu_custom_call.1} parent=5 // pred_check
        %p2030 = pneg %p2029
      $region50: #{tpu_custom_call.1} parent=5 // pred_check_branch
        %2032 = sbr.rel (%p2030) target = $region52
      $region51: #{tpu_custom_call.1} parent=5 // pred_region
        %s2033 = ssub.s32 %s19, 2
        // Predicated region
        $region53: #{tpu_custom_call.1} parent=51 // pred_check
          %p2034 = pneg %p116
        $region54: #{tpu_custom_call.1} parent=51 // pred_check_branch
          %2036 = sbr.rel (%p2034) target = $region56
        $region55: #{tpu_custom_call.1} parent=51 // pred_region
          %s2037 = smul.u32 8, %s25
          %p2038 = scmp.lt.s32.totalorder %s2037, 15
          %s2039 = scalar_select %p2038, %s2037, 15
          %s2040 = smul.addr %s2039, 4
          %s2041 = scalar_lea.vmem %s3, %s2040
        $region56: #{tpu_custom_call.1} parent=51 // pred_fallthru
          _
        // Predicated region
        $region57: #{tpu_custom_call.1} parent=51 // pred_check
          %p2042 = pneg %p142
        $region58: #{tpu_custom_call.1} parent=51 // pred_check_branch
          %2044 = sbr.rel (%p2042) target = $region60
        $region59: #{tpu_custom_call.1} parent=51 // pred_region
          %s2045 = sand.u32 %s127, 1
          %s2046 = scalar_lea.sflag [#allocation3], %s2045
          %s2047 = sand.u32 %s127, 1
          %s2048 = smul.addr %s2047, 2
          %s2049 = scalar_lea.vmem [#allocation2], %s2048
          %2050 = dma.done %s2046, 32
        $region60: #{tpu_custom_call.1} parent=51 // pred_fallthru
          _
        // Predicated region
        $region61: #{tpu_custom_call.1} parent=51 // pred_check
          %p2051 = pneg %p168
        $region62: #{tpu_custom_call.1} parent=51 // pred_check_branch
          %2053 = sbr.rel (%p2051) target = $region64
        $region63: #{tpu_custom_call.1} parent=51 // pred_region
          %s2054 = smul.u32 8, %s25
          %p2055 = scmp.lt.s32.totalorder %s2054, 15
          %s2056 = scalar_select %p2055, %s2054, 15
          %s2057 = smul.addr %s2056, 4
          %s2058 = scalar_lea.vmem %s5, %s2057
        $region64: #{tpu_custom_call.1} parent=51 // pred_fallthru
          _
        // Predicated region
        $region65: #{tpu_custom_call.1} parent=51 // pred_check
          %p2059 = pneg %p194
        $region66: #{tpu_custom_call.1} parent=51 // pred_check_branch
          %2061 = sbr.rel (%p2059) target = $region68
        $region67: #{tpu_custom_call.1} parent=51 // pred_region
          %s2062 = sand.u32 %s179, 1
          %s2063 = scalar_lea.sflag [#allocation5], %s2062
          %s2064 = sand.u32 %s179, 1
          %s2065 = smul.addr %s2064, 2
          %s2066 = scalar_lea.vmem [#allocation4], %s2065
          %2067 = dma.done %s2063, 32
        $region68: #{tpu_custom_call.1} parent=51 // pred_fallthru
          _
      $region52: #{tpu_custom_call.1} parent=5 // pred_fallthru
        _
    $region6: #{tpu_custom_call.1} parent=1 // loop_footer
      %s23 = sadd.s32 1, %s19
    $region7: #{tpu_custom_call.1} parent=1 // loop_footer_branch
      %18 = sbr.rel target = $region3
    $region8: #{tpu_custom_call.1} parent=1 // loop_exit
      _
    %2068 = vsyncpa [#allocation3], 1
    %s2069 = scalar_lea.sflag [#allocation3], 1
    %2070 = vsyncpa %s2069, 1
    %2071 = vsyncpa [#allocation5], 1
    %s2072 = scalar_lea.sflag [#allocation5], 1
    %2073 = vsyncpa %s2072, 1

</llo_original>
